<compile_context>
chip_gen: v7x
topology: tpu7x:2x2x1
jax: 0.10.0
libtpu: 0.0.40
codegen_flags: <defaults>
</compile_context>

<pallas_src>
import functools

import jax
import jax.numpy as jnp
from jax.experimental import pallas as pl
from jax.experimental.pallas import tpu as pltpu

_LANE = 128
_SUBLANE = 8


def _round_up(x, m):
    return ((x + m - 1) // m) * m


# ----------------------------------------------------------------------------
# Pallas kernel: one LSTM layer = fused input projection + sequential
# recurrence.  Grid = (batch_blocks, time_blocks); h/c carried in VMEM scratch
# across time blocks (time axis is "arbitrary").
# ----------------------------------------------------------------------------
def _lstm_layer_kernel(x_ref, wih_ref, whh_ref, b_ref,
                       out_ref, hN_ref, cN_ref,
                       gx_sc, h_sc, c_sc,
                       *, hp, t_block, unroll, last_t_in_last_blk):
    ti = pl.program_id(1)
    n_t = pl.num_programs(1)

    @pl.when(ti == 0)
    def _init():
        h_sc[...] = jnp.zeros_like(h_sc)
        c_sc[...] = jnp.zeros_like(c_sc)

    w_ih = wih_ref[...]          # (Din, 4*Hp) bf16, resident (Buffered(1))
    w_hh = whh_ref[...]          # (Hp,  4*Hp) bf16, resident (Buffered(1))
    bias = b_ref[...]            # (1,   4*Hp) f32

    # Fused, time-independent input projection for the whole time block:
    # one large-M MXU matmul, result kept in VMEM scratch (never hits HBM).
    tb, bb, din = x_ref.shape
    x_blk = x_ref[...].reshape(tb * bb, din).astype(w_ih.dtype)
    gx = jnp.dot(x_blk, w_ih, preferred_element_type=jnp.float32) + bias
    gx_sc[...] = gx.reshape(tb, bb, 4 * hp)

    def step(t, carry):
        h_prev = h_sc[...]                     # (bb, Hp) f32
        c_prev = c_sc[...]
        gates = gx_sc[t] + jnp.dot(h_prev.astype(w_hh.dtype), w_hh,
                                   preferred_element_type=jnp.float32)
        i_g = jax.nn.sigmoid(gates[:, 0 * hp:1 * hp])    # input gate
        f_g = jax.nn.sigmoid(gates[:, 1 * hp:2 * hp])    # forget gate
        g_g = jnp.tanh(gates[:, 2 * hp:3 * hp])          # cell candidate
        o_g = jax.nn.sigmoid(gates[:, 3 * hp:4 * hp])    # output gate

        c_new = f_g * c_prev + i_g * g_g
        h_new = o_g * jnp.tanh(c_new)

        h_sc[...] = h_new
        c_sc[...] = c_new
        out_ref[t] = h_new                     # lane-aligned (bb, Hp) store

        if last_t_in_last_blk is not None:
            # Sequence was zero-padded in time: capture the true final state.
            @pl.when(jnp.logical_and(ti == n_t - 1, t == last_t_in_last_blk))
            def _cap():
                hN_ref[...] = h_new
                cN_ref[...] = c_new
        return carry

    def run_chunk(base):
        jax.lax.fori_loop(0, unroll, lambda k, c: step(base + k, c), 0,
                          unroll=True)

    n_outer = t_block // unroll                # exact by construction
    if n_outer == 1:
        run_chunk(0)
    else:
        @pl.loop(0, n_outer)
        def _(outer):
            run_chunk(pl.multiple_of(outer * unroll, unroll))

    if last_t_in_last_blk is None:
        @pl.when(ti == n_t - 1)
        def _final():
            hN_ref[...] = h_sc[...]
            cN_ref[...] = c_sc[...]


# ----------------------------------------------------------------------------
# VMEM-budgeted planning of the time block (safe for v7x's 64 MiB per core).
# ----------------------------------------------------------------------------
def _plan_layer(S, Bp, Din, Hp, w_bytes, budget_bytes=40 << 20, max_t=128):
    fixed = (Din * 4 * Hp * w_bytes      # W_ih^T (Buffered(1) -> single copy)
             + Hp * 4 * Hp * w_bytes     # W_hh^T (Buffered(1) -> single copy)
             + 4 * Hp * 4                # bias
             + 4 * Bp * Hp * 4           # h_n / c_n output buffers
             + 2 * Bp * Hp * 4)          # h / c carry scratch
    per_t = Bp * (2 * Din * 4            # x block (double buffered, f32)
                  + 2 * Hp * 4           # out block (double buffered, f32)
                  + 4 * Hp * 4)          # gate-x VMEM scratch (f32)
    t_raw = int(max(1, min((budget_bytes - fixed) // per_t, max_t, S)))
    t_block = (t_raw // 8) * 8 if t_raw >= 8 else t_raw
    unroll = min(t_block, 8)
    vmem_limit = int(min(max(2 * (fixed + t_block * per_t) + (4 << 20),
                             16 << 20), 64 << 20))
    return int(t_block), int(unroll), vmem_limit


def lstm_layer_pallas(x, w_ih, w_hh, b_ih, b_hh, *,
                      mxu_dtype=jnp.bfloat16, num_batch_blocks=1):
    """One LSTM layer.

    x: (S, Bp, Din) f32 with sublane-padded batch Bp; any x columns beyond
    w_ih.shape[1] must be exactly zero (lane padding from the previous layer).
    Returns padded (S, Bp, Hp), (Bp, Hp), (Bp, Hp); strip padding at the end.
    num_batch_blocks: set to 2 on v7x (2 TensorCores/chip) to split the
    "parallel" batch axis; keep 1 on v5e/v6e.
    """
    S, Bp, Din = x.shape
    fourH, Dw = w_ih.shape
    H = fourH // 4
    assert Din >= Dw and Bp % (_SUBLANE * num_batch_blocks) == 0
    Hp = _round_up(max(H, _LANE), _LANE)
    w_bytes = jnp.dtype(mxu_dtype).itemsize

    # ---- one-time weight prep (plain XLA): transpose, pad, cast to bf16.
    w_ih_t = jnp.transpose(w_ih.reshape(4, H, Dw), (2, 0, 1))       # (Dw,4,H)
    w_ih_t = jnp.pad(w_ih_t, ((0, Din - Dw), (0, 0), (0, Hp - H)))
    w_ih_t = w_ih_t.reshape(Din, 4 * Hp).astype(mxu_dtype)

    w_hh_t = jnp.transpose(w_hh.reshape(4, H, H), (2, 0, 1))        # (H,4,H)
    w_hh_t = jnp.pad(w_hh_t, ((0, Hp - H), (0, 0), (0, Hp - H)))
    w_hh_t = w_hh_t.reshape(Hp, 4 * Hp).astype(mxu_dtype)

    bias = jnp.pad((b_ih + b_hh).reshape(4, H), ((0, 0), (0, Hp - H)))
    bias = bias.reshape(1, 4 * Hp).astype(jnp.float32)

    # ---- time blocking: pad S up to a multiple of t_block (no divisor search)
    t_block, unroll, vmem_limit = _plan_layer(S, Bp, Din, Hp, w_bytes)
    S_pad = _round_up(S, t_block)
    num_t_blocks = S_pad // t_block
    if S_pad != S:
        x = jnp.pad(x, ((0, S_pad - S), (0, 0), (0, 0)))
        last_t_in_last_blk = (S - 1) % t_block
    else:
        last_t_in_last_blk = None

    bb = Bp // num_batch_blocks
    kernel = functools.partial(_lstm_layer_kernel, hp=Hp, t_block=t_block,
                               unroll=unroll,
                               last_t_in_last_blk=last_t_in_last_blk)

    out, h_n, c_n = pl.pallas_call(
        kernel,
        out_shape=(jax.ShapeDtypeStruct((S_pad, Bp, Hp), jnp.float32),
                   jax.ShapeDtypeStruct((Bp, Hp), jnp.float32),
                   jax.ShapeDtypeStruct((Bp, Hp), jnp.float32)),
        grid_spec=pltpu.PrefetchScalarGridSpec(
            num_scalar_prefetch=0,
            grid=(num_batch_blocks, num_t_blocks),
            in_specs=[
                pl.BlockSpec((t_block, bb, Din), lambda bi, ti: (ti, bi, 0)),
                pl.BlockSpec((Din, 4 * Hp), lambda bi, ti: (0, 0),
                             pipeline_mode=pl.Buffered(1)),     # W_ih^T resident
                pl.BlockSpec((Hp, 4 * Hp), lambda bi, ti: (0, 0),
                             pipeline_mode=pl.Buffered(1)),     # W_hh^T resident
                pl.BlockSpec((1, 4 * Hp), lambda bi, ti: (0, 0),
                             pipeline_mode=pl.Buffered(1)),     # bias resident
            ],
            out_specs=[
                pl.BlockSpec((t_block, bb, Hp), lambda bi, ti: (ti, bi, 0)),
                pl.BlockSpec((bb, Hp), lambda bi, ti: (bi, 0)),
                pl.BlockSpec((bb, Hp), lambda bi, ti: (bi, 0)),
            ],
            scratch_shapes=[
                pltpu.VMEM((t_block, bb, 4 * Hp), jnp.float32),  # gate-x block
                pltpu.VMEM((bb, Hp), jnp.float32),               # h carry
                pltpu.VMEM((bb, Hp), jnp.float32),               # c carry
            ],
        ),
        compiler_params=pltpu.CompilerParams(
            dimension_semantics=("parallel", "arbitrary"),
            vmem_limit_bytes=vmem_limit),
    )(x, w_ih_t, w_hh_t, bias)

    if S_pad != S:
        out = out[:S]
    return out, h_n, c_n


# ----------------------------------------------------------------------------
# Encoder forward (eval mode): embedding -> dropout(identity) -> stacked LSTM.
# Padding (batch to sublane, hidden to lane) is applied once and stripped once.
# ----------------------------------------------------------------------------
def encoder_forward(tokens, params, *, mxu_dtype=jnp.bfloat16):
    S, B = tokens.shape
    embedded = params["embedding"][tokens]          # (S, B, E) gather, plain XLA
    # TODO(synk): nn.Dropout (post-embedding) and nn.LSTM inter-layer dropout
    # are identity in eval mode; training-mode dropout is not modeled here.
    Bp = _round_up(B, _SUBLANE)
    x = jnp.pad(embedded, ((0, 0), (0, Bp - B), (0, 0))).astype(jnp.float32)

    h_list, c_list = [], []
    for (w_ih, w_hh, b_ih, b_hh) in params["lstm"]:
        x, h_n, c_n = lstm_layer_pallas(x, w_ih, w_hh, b_ih, b_hh,
                                        mxu_dtype=mxu_dtype)
        h_list.append(h_n)
        c_list.append(c_n)

    H = params["lstm"][-1][1].shape[1]
    outputs = x[:, :B, :H]                          # strip padding once
    h = jnp.stack([hn[:B, :H] for hn in h_list], axis=0)
    c = jnp.stack([cn[:B, :H] for cn in c_list], axis=0)
    return outputs, (h, c)


# ----------------------------------------------------------------------------
# Pure-JAX f32 reference (numerical sanity check).
# ----------------------------------------------------------------------------
def encoder_reference(tokens, params):
    x = params["embedding"][tokens]
    h_list, c_list = [], []
    for (w_ih, w_hh, b_ih, b_hh) in params["lstm"]:
        H = w_hh.shape[1]
        B = x.shape[1]

        def step(carry, x_t):
            h_prev, c_prev = carry
            gates = x_t @ w_ih.T + h_prev @ w_hh.T + b_ih + b_hh
            i_g = jax.nn.sigmoid(gates[:, 0 * H:1 * H])
            f_g = jax.nn.sigmoid(gates[:, 1 * H:2 * H])
            g_g = jnp.tanh(gates[:, 2 * H:3 * H])
            o_g = jax.nn.sigmoid(gates[:, 3 * H:4 * H])
            c_new = f_g * c_prev + i_g * g_g
            h_new = o_g * jnp.tanh(c_new)
            return (h_new, c_new), h_new

        init = (jnp.zeros((B, H), jnp.float32), jnp.zeros((B, H), jnp.float32))
        (h_n, c_n), outs = jax.lax.scan(step, init, x)
        x = outs
        h_list.append(h_n)
        c_list.append(c_n)
    return x, (jnp.stack(h_list), jnp.stack(c_list))


# ----------------------------------------------------------------------------
# Deterministic parameter init (mirrors nn.Embedding + nn.LSTM shapes).
# ----------------------------------------------------------------------------
def init_params(key, vocab_size, emb_dim, hidden_size, num_layers):
    keys = jax.random.split(key, 1 + 4 * num_layers)
    params = {
        "embedding": jax.random.normal(keys[0], (vocab_size, emb_dim),
                                       dtype=jnp.float32),
        "lstm": [],
    }
    k = 1.0 / jnp.sqrt(hidden_size)
    for layer in range(num_layers):
        in_dim = emb_dim if layer == 0 else hidden_size
        k0, k1, k2, k3 = keys[1 + 4 * layer: 1 + 4 * (layer + 1)]
        w_ih = jax.random.uniform(k0, (4 * hidden_size, in_dim),
                                  minval=-k, maxval=k, dtype=jnp.float32)
        w_hh = jax.random.uniform(k1, (4 * hidden_size, hidden_size),
                                  minval=-k, maxval=k, dtype=jnp.float32)
        b_ih = jax.random.uniform(k2, (4 * hidden_size,),
                                  minval=-k, maxval=k, dtype=jnp.float32)
        b_hh = jax.random.uniform(k3, (4 * hidden_size,),
                                  minval=-k, maxval=k, dtype=jnp.float32)
        params["lstm"].append((w_ih, w_hh, b_ih, b_hh))
    return params


if __name__ == "__main__":
    VOCAB = 32        # Encoder input_size / embedding num_embeddings
    EMB_DIM = 16      # embedding.embedding_dim
    HIDDEN = 32       # hidden_size
    NUM_LAYERS = 2
    SEQ = 8
    BATCH = 2

    root = jax.random.PRNGKey(0)
    k_params, k_tokens = jax.random.split(root)
    params = init_params(k_params, VOCAB, EMB_DIM, HIDDEN, NUM_LAYERS)
    tokens = jax.random.randint(k_tokens, (SEQ, BATCH), 0, VOCAB, dtype=jnp.int32)

    outputs, (h, c) = encoder_forward(tokens, params)
    outputs = jax.block_until_ready(outputs)
    h = jax.block_until_ready(h)
    c = jax.block_until_ready(c)

    assert outputs.shape == (SEQ, BATCH, HIDDEN)
    assert h.shape == (NUM_LAYERS, BATCH, HIDDEN)
    assert c.shape == (NUM_LAYERS, BATCH, HIDDEN)

    # Numerical sanity check against the f32 reference.  Kernel uses bf16 MXU
    # weight operands (f32 accumulation), hence the slightly loose tolerance.
    ref_out, (ref_h, ref_c) = encoder_reference(tokens, params)
    assert jnp.allclose(outputs, ref_out, rtol=3e-2, atol=3e-2)
    assert jnp.allclose(h, ref_h, rtol=3e-2, atol=3e-2)
    assert jnp.allclose(c, ref_c, rtol=3e-2, atol=3e-2)

    print("KERNEL_OK")
</pallas_src>

<mosaic_0001>
module attributes {stable_mosaic.version = 11 : i64} {
  func.func @_lstm_layer_kernel(%arg0: i32, %arg1: i32, %arg2: memref<8x8x16xf32, #tpu.memory_space<vmem>>, %arg3: memref<16x512xbf16, #tpu.memory_space<vmem>>, %arg4: memref<128x512xbf16, #tpu.memory_space<vmem>>, %arg5: memref<1x512xf32, #tpu.memory_space<vmem>>, %arg6: memref<8x8x128xf32, #tpu.memory_space<vmem>>, %arg7: memref<8x128xf32, #tpu.memory_space<vmem>>, %arg8: memref<8x128xf32, #tpu.memory_space<vmem>>, %arg9: memref<8x8x512xf32, #tpu.memory_space<vmem>>, %arg10: memref<8x128xf32, #tpu.memory_space<vmem>>, %arg11: memref<8x128xf32, #tpu.memory_space<vmem>>) attributes {dimension_semantics = [#tpu.dimension_semantics<parallel>, #tpu.dimension_semantics<arbitrary>], iteration_bounds = array<i64: 1, 1>, scalar_prefetch = 0 : i64, scratch_operands = 3 : i64, tpu.core_type = #tpu.core_type<tc>, window_params = [{transform_indices = @transform_0, window_bounds = array<i64: 8, 8, 16>}, {pipeline_mode = #tpu.pipeline_mode<synchronous>, transform_indices = @transform_1, window_bounds = array<i64: 16, 512>}, {pipeline_mode = #tpu.pipeline_mode<synchronous>, transform_indices = @transform_2, window_bounds = array<i64: 128, 512>}, {pipeline_mode = #tpu.pipeline_mode<synchronous>, transform_indices = @transform_3, window_bounds = array<i64: 1, 512>}, {transform_indices = @transform_4, window_bounds = array<i64: 8, 8, 128>}, {transform_indices = @transform_5, window_bounds = array<i64: 8, 128>}, {transform_indices = @transform_6, window_bounds = array<i64: 8, 128>}]} {
    %c0_i32 = arith.constant 0 : i32
    %0 = arith.cmpi eq, %arg1, %c0_i32 : i32
    %1 = arith.extui %0 : i1 to i32
    %c0_i32_0 = arith.constant 0 : i32
    %2 = arith.cmpi ne, %1, %c0_i32_0 : i32
    scf.if %2 {
      %cst_151 = arith.constant 0.000000e+00 : f32
      %337 = vector.broadcast %cst_151 : f32 to vector<8x128xf32>
      %c0_152 = arith.constant 0 : index
      %c0_153 = arith.constant 0 : index
      %338 = vector.load %arg10[%c0_152, %c0_153] : memref<8x128xf32, #tpu.memory_space<vmem>>, vector<8x128xf32>
      tpu.vector_store %arg10[%c0_152, %c0_153], %337 {strides = array<i32>} : memref<8x128xf32, #tpu.memory_space<vmem>>, vector<8x128xf32>,
      %cst_154 = arith.constant 0.000000e+00 : f32
      %339 = vector.broadcast %cst_154 : f32 to vector<8x128xf32>
      %c0_155 = arith.constant 0 : index
      %c0_156 = arith.constant 0 : index
      %340 = vector.load %arg11[%c0_155, %c0_156] : memref<8x128xf32, #tpu.memory_space<vmem>>, vector<8x128xf32>
      tpu.vector_store %arg11[%c0_155, %c0_156], %339 {strides = array<i32>} : memref<8x128xf32, #tpu.memory_space<vmem>>, vector<8x128xf32>,
    } else {
    }
    %c0 = arith.constant 0 : index
    %c0_1 = arith.constant 0 : index
    %3 = vector.load %arg3[%c0, %c0_1] : memref<16x512xbf16, #tpu.memory_space<vmem>>, vector<16x512xbf16>
    %c0_2 = arith.constant 0 : index
    %c0_3 = arith.constant 0 : index
    %4 = vector.load %arg4[%c0_2, %c0_3] : memref<128x512xbf16, #tpu.memory_space<vmem>>, vector<128x512xbf16>
    %c0_4 = arith.constant 0 : index
    %c0_5 = arith.constant 0 : index
    %5 = vector.load %arg5[%c0_4, %c0_5] : memref<1x512xf32, #tpu.memory_space<vmem>>, vector<1x512xf32>
    %c0_6 = arith.constant 0 : index
    %c0_7 = arith.constant 0 : index
    %c0_8 = arith.constant 0 : index
    %6 = vector.load %arg2[%c0_6, %c0_7, %c0_8] : memref<8x8x16xf32, #tpu.memory_space<vmem>>, vector<8x8x16xf32>
    %7 = vector.shape_cast %6 : vector<8x8x16xf32> to vector<64x16xf32>
    %8 = arith.truncf %7 : vector<64x16xf32> to vector<64x16xbf16>
    %cst = arith.constant dense<0.000000e+00> : vector<64x512xf32>
    %9 = tpu.matmul %8, %3, %cst {dimension_numbers = #tpu.dot_dimension_numbers<[1], [0], [0], [1], [0, 0, 1, 1], [], []>} : vector<64x16xbf16>, vector<16x512xbf16>, vector<64x512xf32> -> vector<64x512xf32>
    %10 = vector.broadcast %5 : vector<1x512xf32> to vector<64x512xf32>
    %11 = arith.addf %9, %10 : vector<64x512xf32>
    %12 = vector.shape_cast %11 : vector<64x512xf32> to vector<8x8x512xf32>
    %c0_9 = arith.constant 0 : index
    %c0_10 = arith.constant 0 : index
    %c0_11 = arith.constant 0 : index
    %13 = vector.load %arg9[%c0_9, %c0_10, %c0_11] : memref<8x8x512xf32, #tpu.memory_space<vmem>>, vector<8x8x512xf32>
    tpu.vector_store %arg9[%c0_9, %c0_10, %c0_11], %12 {strides = array<i32>} : memref<8x8x512xf32, #tpu.memory_space<vmem>>, vector<8x8x512xf32>,
    %c0_i32_12 = arith.constant 0 : i32
    %c0_i32_13 = arith.constant 0 : i32
    %14 = arith.addi %c0_i32_13, %c0_i32_12 : i32
    %c0_14 = arith.constant 0 : index
    %c0_15 = arith.constant 0 : index
    %15 = vector.load %arg10[%c0_14, %c0_15] : memref<8x128xf32, #tpu.memory_space<vmem>>, vector<8x128xf32>
    %c0_16 = arith.constant 0 : index
    %c0_17 = arith.constant 0 : index
    %16 = vector.load %arg11[%c0_16, %c0_17] : memref<8x128xf32, #tpu.memory_space<vmem>>, vector<8x128xf32>
    %17 = arith.index_cast %14 : i32 to index
    %c0_18 = arith.constant 0 : index
    %c0_19 = arith.constant 0 : index
    %18 = vector.load %arg9[%17, %c0_18, %c0_19] : memref<8x8x512xf32, #tpu.memory_space<vmem>>, vector<1x8x512xf32>
    %19 = vector.shape_cast %18 : vector<1x8x512xf32> to vector<8x512xf32>
    %20 = arith.truncf %15 : vector<8x128xf32> to vector<8x128xbf16>
    %cst_20 = arith.constant dense<0.000000e+00> : vector<8x512xf32>
    %21 = tpu.matmul %20, %4, %cst_20 {dimension_numbers = #tpu.dot_dimension_numbers<[1], [0], [0], [1], [0, 0, 1, 1], [], []>} : vector<8x128xbf16>, vector<128x512xbf16>, vector<8x512xf32> -> vector<8x512xf32>
    %22 = arith.addf %19, %21 : vector<8x512xf32>
    %23 = vector.extract_strided_slice %22 {offsets = [0, 0], sizes = [8, 128], strides = [1, 1]} : vector<8x512xf32> to vector<8x128xf32>
    %24 = arith.negf %23 : vector<8x128xf32>
    %25 = math.exp %24 : vector<8x128xf32>
    %cst_21 = arith.constant 1.000000e+00 : f32
    %26 = vector.broadcast %cst_21 : f32 to vector<8x128xf32>
    %27 = arith.addf %26, %25 : vector<8x128xf32>
    %28 = arith.divf %26, %27 : vector<8x128xf32>
    %29 = vector.extract_strided_slice %22 {offsets = [0, 128], sizes = [8, 128], strides = [1, 1]} : vector<8x512xf32> to vector<8x128xf32>
    %30 = arith.negf %29 : vector<8x128xf32>
    %31 = math.exp %30 : vector<8x128xf32>
    %cst_22 = arith.constant 1.000000e+00 : f32
    %32 = vector.broadcast %cst_22 : f32 to vector<8x128xf32>
    %33 = arith.addf %32, %31 : vector<8x128xf32>
    %34 = arith.divf %32, %33 : vector<8x128xf32>
    %35 = vector.extract_strided_slice %22 {offsets = [0, 256], sizes = [8, 128], strides = [1, 1]} : vector<8x512xf32> to vector<8x128xf32>
    %36 = math.tanh %35 : vector<8x128xf32>
    %37 = vector.extract_strided_slice %22 {offsets = [0, 384], sizes = [8, 128], strides = [1, 1]} : vector<8x512xf32> to vector<8x128xf32>
    %38 = arith.negf %37 : vector<8x128xf32>
    %39 = math.exp %38 : vector<8x128xf32>
    %cst_23 = arith.constant 1.000000e+00 : f32
    %40 = vector.broadcast %cst_23 : f32 to vector<8x128xf32>
    %41 = arith.addf %40, %39 : vector<8x128xf32>
    %42 = arith.divf %40, %41 : vector<8x128xf32>
    %43 = arith.mulf %34, %16 : vector<8x128xf32>
    %44 = arith.mulf %28, %36 : vector<8x128xf32>
    %45 = arith.addf %43, %44 : vector<8x128xf32>
    %46 = math.tanh %45 : vector<8x128xf32>
    %47 = arith.mulf %42, %46 : vector<8x128xf32>
    %c0_24 = arith.constant 0 : index
    %c0_25 = arith.constant 0 : index
    %48 = vector.load %arg10[%c0_24, %c0_25] : memref<8x128xf32, #tpu.memory_space<vmem>>, vector<8x128xf32>
    tpu.vector_store %arg10[%c0_24, %c0_25], %47 {strides = array<i32>} : memref<8x128xf32, #tpu.memory_space<vmem>>, vector<8x128xf32>,
    %c0_26 = arith.constant 0 : index
    %c0_27 = arith.constant 0 : index
    %49 = vector.load %arg11[%c0_26, %c0_27] : memref<8x128xf32, #tpu.memory_space<vmem>>, vector<8x128xf32>
    tpu.vector_store %arg11[%c0_26, %c0_27], %45 {strides = array<i32>} : memref<8x128xf32, #tpu.memory_space<vmem>>, vector<8x128xf32>,
    %50 = arith.index_cast %14 : i32 to index
    %c0_28 = arith.constant 0 : index
    %c0_29 = arith.constant 0 : index
    %51 = vector.load %arg6[%50, %c0_28, %c0_29] : memref<8x8x128xf32, #tpu.memory_space<vmem>>, vector<1x8x128xf32>
    %52 = vector.shape_cast %51 : vector<1x8x128xf32> to vector<8x128xf32>
    %53 = vector.shape_cast %47 : vector<8x128xf32> to vector<1x8x128xf32>
    tpu.vector_store %arg6[%50, %c0_28, %c0_29], %53 {strides = array<i32>} : memref<8x8x128xf32, #tpu.memory_space<vmem>>, vector<1x8x128xf32>,
    %c1_i32 = arith.constant 1 : i32
    %c0_i32_30 = arith.constant 0 : i32
    %54 = arith.addi %c0_i32_30, %c1_i32 : i32
    %c0_31 = arith.constant 0 : index
    %c0_32 = arith.constant 0 : index
    %55 = vector.load %arg10[%c0_31, %c0_32] : memref<8x128xf32, #tpu.memory_space<vmem>>, vector<8x128xf32>
    %c0_33 = arith.constant 0 : index
    %c0_34 = arith.constant 0 : index
    %56 = vector.load %arg11[%c0_33, %c0_34] : memref<8x128xf32, #tpu.memory_space<vmem>>, vector<8x128xf32>
    %57 = arith.index_cast %54 : i32 to index
    %c0_35 = arith.constant 0 : index
    %c0_36 = arith.constant 0 : index
    %58 = vector.load %arg9[%57, %c0_35, %c0_36] : memref<8x8x512xf32, #tpu.memory_space<vmem>>, vector<1x8x512xf32>
    %59 = vector.shape_cast %58 : vector<1x8x512xf32> to vector<8x512xf32>
    %60 = arith.truncf %55 : vector<8x128xf32> to vector<8x128xbf16>
    %cst_37 = arith.constant dense<0.000000e+00> : vector<8x512xf32>
    %61 = tpu.matmul %60, %4, %cst_37 {dimension_numbers = #tpu.dot_dimension_numbers<[1], [0], [0], [1], [0, 0, 1, 1], [], []>} : vector<8x128xbf16>, vector<128x512xbf16>, vector<8x512xf32> -> vector<8x512xf32>
    %62 = arith.addf %59, %61 : vector<8x512xf32>
    %63 = vector.extract_strided_slice %62 {offsets = [0, 0], sizes = [8, 128], strides = [1, 1]} : vector<8x512xf32> to vector<8x128xf32>
    %64 = arith.negf %63 : vector<8x128xf32>
    %65 = math.exp %64 : vector<8x128xf32>
    %cst_38 = arith.constant 1.000000e+00 : f32
    %66 = vector.broadcast %cst_38 : f32 to vector<8x128xf32>
    %67 = arith.addf %66, %65 : vector<8x128xf32>
    %68 = arith.divf %66, %67 : vector<8x128xf32>
    %69 = vector.extract_strided_slice %62 {offsets = [0, 128], sizes = [8, 128], strides = [1, 1]} : vector<8x512xf32> to vector<8x128xf32>
    %70 = arith.negf %69 : vector<8x128xf32>
    %71 = math.exp %70 : vector<8x128xf32>
    %cst_39 = arith.constant 1.000000e+00 : f32
    %72 = vector.broadcast %cst_39 : f32 to vector<8x128xf32>
    %73 = arith.addf %72, %71 : vector<8x128xf32>
    %74 = arith.divf %72, %73 : vector<8x128xf32>
    %75 = vector.extract_strided_slice %62 {offsets = [0, 256], sizes = [8, 128], strides = [1, 1]} : vector<8x512xf32> to vector<8x128xf32>
    %76 = math.tanh %75 : vector<8x128xf32>
    %77 = vector.extract_strided_slice %62 {offsets = [0, 384], sizes = [8, 128], strides = [1, 1]} : vector<8x512xf32> to vector<8x128xf32>
    %78 = arith.negf %77 : vector<8x128xf32>
    %79 = math.exp %78 : vector<8x128xf32>
    %cst_40 = arith.constant 1.000000e+00 : f32
    %80 = vector.broadcast %cst_40 : f32 to vector<8x128xf32>
    %81 = arith.addf %80, %79 : vector<8x128xf32>
    %82 = arith.divf %80, %81 : vector<8x128xf32>
    %83 = arith.mulf %74, %56 : vector<8x128xf32>
    %84 = arith.mulf %68, %76 : vector<8x128xf32>
    %85 = arith.addf %83, %84 : vector<8x128xf32>
    %86 = math.tanh %85 : vector<8x128xf32>
    %87 = arith.mulf %82, %86 : vector<8x128xf32>
    %c0_41 = arith.constant 0 : index
    %c0_42 = arith.constant 0 : index
    %88 = vector.load %arg10[%c0_41, %c0_42] : memref<8x128xf32, #tpu.memory_space<vmem>>, vector<8x128xf32>
    tpu.vector_store %arg10[%c0_41, %c0_42], %87 {strides = array<i32>} : memref<8x128xf32, #tpu.memory_space<vmem>>, vector<8x128xf32>,
    %c0_43 = arith.constant 0 : index
    %c0_44 = arith.constant 0 : index
    %89 = vector.load %arg11[%c0_43, %c0_44] : memref<8x128xf32, #tpu.memory_space<vmem>>, vector<8x128xf32>
    tpu.vector_store %arg11[%c0_43, %c0_44], %85 {strides = array<i32>} : memref<8x128xf32, #tpu.memory_space<vmem>>, vector<8x128xf32>,
    %90 = arith.index_cast %54 : i32 to index
    %c0_45 = arith.constant 0 : index
    %c0_46 = arith.constant 0 : index
    %91 = vector.load %arg6[%90, %c0_45, %c0_46] : memref<8x8x128xf32, #tpu.memory_space<vmem>>, vector<1x8x128xf32>
    %92 = vector.shape_cast %91 : vector<1x8x128xf32> to vector<8x128xf32>
    %93 = vector.shape_cast %87 : vector<8x128xf32> to vector<1x8x128xf32>
    tpu.vector_store %arg6[%90, %c0_45, %c0_46], %93 {strides = array<i32>} : memref<8x8x128xf32, #tpu.memory_space<vmem>>, vector<1x8x128xf32>,
    %c2_i32 = arith.constant 2 : i32
    %c0_i32_47 = arith.constant 0 : i32
    %94 = arith.addi %c0_i32_47, %c2_i32 : i32
    %c0_48 = arith.constant 0 : index
    %c0_49 = arith.constant 0 : index
    %95 = vector.load %arg10[%c0_48, %c0_49] : memref<8x128xf32, #tpu.memory_space<vmem>>, vector<8x128xf32>
    %c0_50 = arith.constant 0 : index
    %c0_51 = arith.constant 0 : index
    %96 = vector.load %arg11[%c0_50, %c0_51] : memref<8x128xf32, #tpu.memory_space<vmem>>, vector<8x128xf32>
    %97 = arith.index_cast %94 : i32 to index
    %c0_52 = arith.constant 0 : index
    %c0_53 = arith.constant 0 : index
    %98 = vector.load %arg9[%97, %c0_52, %c0_53] : memref<8x8x512xf32, #tpu.memory_space<vmem>>, vector<1x8x512xf32>
    %99 = vector.shape_cast %98 : vector<1x8x512xf32> to vector<8x512xf32>
    %100 = arith.truncf %95 : vector<8x128xf32> to vector<8x128xbf16>
    %cst_54 = arith.constant dense<0.000000e+00> : vector<8x512xf32>
    %101 = tpu.matmul %100, %4, %cst_54 {dimension_numbers = #tpu.dot_dimension_numbers<[1], [0], [0], [1], [0, 0, 1, 1], [], []>} : vector<8x128xbf16>, vector<128x512xbf16>, vector<8x512xf32> -> vector<8x512xf32>
    %102 = arith.addf %99, %101 : vector<8x512xf32>
    %103 = vector.extract_strided_slice %102 {offsets = [0, 0], sizes = [8, 128], strides = [1, 1]} : vector<8x512xf32> to vector<8x128xf32>
    %104 = arith.negf %103 : vector<8x128xf32>
    %105 = math.exp %104 : vector<8x128xf32>
    %cst_55 = arith.constant 1.000000e+00 : f32
    %106 = vector.broadcast %cst_55 : f32 to vector<8x128xf32>
    %107 = arith.addf %106, %105 : vector<8x128xf32>
    %108 = arith.divf %106, %107 : vector<8x128xf32>
    %109 = vector.extract_strided_slice %102 {offsets = [0, 128], sizes = [8, 128], strides = [1, 1]} : vector<8x512xf32> to vector<8x128xf32>
    %110 = arith.negf %109 : vector<8x128xf32>
    %111 = math.exp %110 : vector<8x128xf32>
    %cst_56 = arith.constant 1.000000e+00 : f32
    %112 = vector.broadcast %cst_56 : f32 to vector<8x128xf32>
    %113 = arith.addf %112, %111 : vector<8x128xf32>
    %114 = arith.divf %112, %113 : vector<8x128xf32>
    %115 = vector.extract_strided_slice %102 {offsets = [0, 256], sizes = [8, 128], strides = [1, 1]} : vector<8x512xf32> to vector<8x128xf32>
    %116 = math.tanh %115 : vector<8x128xf32>
    %117 = vector.extract_strided_slice %102 {offsets = [0, 384], sizes = [8, 128], strides = [1, 1]} : vector<8x512xf32> to vector<8x128xf32>
    %118 = arith.negf %117 : vector<8x128xf32>
    %119 = math.exp %118 : vector<8x128xf32>
    %cst_57 = arith.constant 1.000000e+00 : f32
    %120 = vector.broadcast %cst_57 : f32 to vector<8x128xf32>
    %121 = arith.addf %120, %119 : vector<8x128xf32>
    %122 = arith.divf %120, %121 : vector<8x128xf32>
    %123 = arith.mulf %114, %96 : vector<8x128xf32>
    %124 = arith.mulf %108, %116 : vector<8x128xf32>
    %125 = arith.addf %123, %124 : vector<8x128xf32>
    %126 = math.tanh %125 : vector<8x128xf32>
    %127 = arith.mulf %122, %126 : vector<8x128xf32>
    %c0_58 = arith.constant 0 : index
    %c0_59 = arith.constant 0 : index
    %128 = vector.load %arg10[%c0_58, %c0_59] : memref<8x128xf32, #tpu.memory_space<vmem>>, vector<8x128xf32>
    tpu.vector_store %arg10[%c0_58, %c0_59], %127 {strides = array<i32>} : memref<8x128xf32, #tpu.memory_space<vmem>>, vector<8x128xf32>,
    %c0_60 = arith.constant 0 : index
    %c0_61 = arith.constant 0 : index
    %129 = vector.load %arg11[%c0_60, %c0_61] : memref<8x128xf32, #tpu.memory_space<vmem>>, vector<8x128xf32>
    tpu.vector_store %arg11[%c0_60, %c0_61], %125 {strides = array<i32>} : memref<8x128xf32, #tpu.memory_space<vmem>>, vector<8x128xf32>,
    %130 = arith.index_cast %94 : i32 to index
    %c0_62 = arith.constant 0 : index
    %c0_63 = arith.constant 0 : index
    %131 = vector.load %arg6[%130, %c0_62, %c0_63] : memref<8x8x128xf32, #tpu.memory_space<vmem>>, vector<1x8x128xf32>
    %132 = vector.shape_cast %131 : vector<1x8x128xf32> to vector<8x128xf32>
    %133 = vector.shape_cast %127 : vector<8x128xf32> to vector<1x8x128xf32>
    tpu.vector_store %arg6[%130, %c0_62, %c0_63], %133 {strides = array<i32>} : memref<8x8x128xf32, #tpu.memory_space<vmem>>, vector<1x8x128xf32>,
    %c3_i32 = arith.constant 3 : i32
    %c0_i32_64 = arith.constant 0 : i32
    %134 = arith.addi %c0_i32_64, %c3_i32 : i32
    %c0_65 = arith.constant 0 : index
    %c0_66 = arith.constant 0 : index
    %135 = vector.load %arg10[%c0_65, %c0_66] : memref<8x128xf32, #tpu.memory_space<vmem>>, vector<8x128xf32>
    %c0_67 = arith.constant 0 : index
    %c0_68 = arith.constant 0 : index
    %136 = vector.load %arg11[%c0_67, %c0_68] : memref<8x128xf32, #tpu.memory_space<vmem>>, vector<8x128xf32>
    %137 = arith.index_cast %134 : i32 to index
    %c0_69 = arith.constant 0 : index
    %c0_70 = arith.constant 0 : index
    %138 = vector.load %arg9[%137, %c0_69, %c0_70] : memref<8x8x512xf32, #tpu.memory_space<vmem>>, vector<1x8x512xf32>
    %139 = vector.shape_cast %138 : vector<1x8x512xf32> to vector<8x512xf32>
    %140 = arith.truncf %135 : vector<8x128xf32> to vector<8x128xbf16>
    %cst_71 = arith.constant dense<0.000000e+00> : vector<8x512xf32>
    %141 = tpu.matmul %140, %4, %cst_71 {dimension_numbers = #tpu.dot_dimension_numbers<[1], [0], [0], [1], [0, 0, 1, 1], [], []>} : vector<8x128xbf16>, vector<128x512xbf16>, vector<8x512xf32> -> vector<8x512xf32>
    %142 = arith.addf %139, %141 : vector<8x512xf32>
    %143 = vector.extract_strided_slice %142 {offsets = [0, 0], sizes = [8, 128], strides = [1, 1]} : vector<8x512xf32> to vector<8x128xf32>
    %144 = arith.negf %143 : vector<8x128xf32>
    %145 = math.exp %144 : vector<8x128xf32>
    %cst_72 = arith.constant 1.000000e+00 : f32
    %146 = vector.broadcast %cst_72 : f32 to vector<8x128xf32>
    %147 = arith.addf %146, %145 : vector<8x128xf32>
    %148 = arith.divf %146, %147 : vector<8x128xf32>
    %149 = vector.extract_strided_slice %142 {offsets = [0, 128], sizes = [8, 128], strides = [1, 1]} : vector<8x512xf32> to vector<8x128xf32>
    %150 = arith.negf %149 : vector<8x128xf32>
    %151 = math.exp %150 : vector<8x128xf32>
    %cst_73 = arith.constant 1.000000e+00 : f32
    %152 = vector.broadcast %cst_73 : f32 to vector<8x128xf32>
    %153 = arith.addf %152, %151 : vector<8x128xf32>
    %154 = arith.divf %152, %153 : vector<8x128xf32>
    %155 = vector.extract_strided_slice %142 {offsets = [0, 256], sizes = [8, 128], strides = [1, 1]} : vector<8x512xf32> to vector<8x128xf32>
    %156 = math.tanh %155 : vector<8x128xf32>
    %157 = vector.extract_strided_slice %142 {offsets = [0, 384], sizes = [8, 128], strides = [1, 1]} : vector<8x512xf32> to vector<8x128xf32>
    %158 = arith.negf %157 : vector<8x128xf32>
    %159 = math.exp %158 : vector<8x128xf32>
    %cst_74 = arith.constant 1.000000e+00 : f32
    %160 = vector.broadcast %cst_74 : f32 to vector<8x128xf32>
    %161 = arith.addf %160, %159 : vector<8x128xf32>
    %162 = arith.divf %160, %161 : vector<8x128xf32>
    %163 = arith.mulf %154, %136 : vector<8x128xf32>
    %164 = arith.mulf %148, %156 : vector<8x128xf32>
    %165 = arith.addf %163, %164 : vector<8x128xf32>
    %166 = math.tanh %165 : vector<8x128xf32>
    %167 = arith.mulf %162, %166 : vector<8x128xf32>
    %c0_75 = arith.constant 0 : index
    %c0_76 = arith.constant 0 : index
    %168 = vector.load %arg10[%c0_75, %c0_76] : memref<8x128xf32, #tpu.memory_space<vmem>>, vector<8x128xf32>
    tpu.vector_store %arg10[%c0_75, %c0_76], %167 {strides = array<i32>} : memref<8x128xf32, #tpu.memory_space<vmem>>, vector<8x128xf32>,
    %c0_77 = arith.constant 0 : index
    %c0_78 = arith.constant 0 : index
    %169 = vector.load %arg11[%c0_77, %c0_78] : memref<8x128xf32, #tpu.memory_space<vmem>>, vector<8x128xf32>
    tpu.vector_store %arg11[%c0_77, %c0_78], %165 {strides = array<i32>} : memref<8x128xf32, #tpu.memory_space<vmem>>, vector<8x128xf32>,
    %170 = arith.index_cast %134 : i32 to index
    %c0_79 = arith.constant 0 : index
    %c0_80 = arith.constant 0 : index
    %171 = vector.load %arg6[%170, %c0_79, %c0_80] : memref<8x8x128xf32, #tpu.memory_space<vmem>>, vector<1x8x128xf32>
    %172 = vector.shape_cast %171 : vector<1x8x128xf32> to vector<8x128xf32>
    %173 = vector.shape_cast %167 : vector<8x128xf32> to vector<1x8x128xf32>
    tpu.vector_store %arg6[%170, %c0_79, %c0_80], %173 {strides = array<i32>} : memref<8x8x128xf32, #tpu.memory_space<vmem>>, vector<1x8x128xf32>,
    %c4_i32 = arith.constant 4 : i32
    %c0_i32_81 = arith.constant 0 : i32
    %174 = arith.addi %c0_i32_81, %c4_i32 : i32
    %c0_82 = arith.constant 0 : index
    %c0_83 = arith.constant 0 : index
    %175 = vector.load %arg10[%c0_82, %c0_83] : memref<8x128xf32, #tpu.memory_space<vmem>>, vector<8x128xf32>
    %c0_84 = arith.constant 0 : index
    %c0_85 = arith.constant 0 : index
    %176 = vector.load %arg11[%c0_84, %c0_85] : memref<8x128xf32, #tpu.memory_space<vmem>>, vector<8x128xf32>
    %177 = arith.index_cast %174 : i32 to index
    %c0_86 = arith.constant 0 : index
    %c0_87 = arith.constant 0 : index
    %178 = vector.load %arg9[%177, %c0_86, %c0_87] : memref<8x8x512xf32, #tpu.memory_space<vmem>>, vector<1x8x512xf32>
    %179 = vector.shape_cast %178 : vector<1x8x512xf32> to vector<8x512xf32>
    %180 = arith.truncf %175 : vector<8x128xf32> to vector<8x128xbf16>
    %cst_88 = arith.constant dense<0.000000e+00> : vector<8x512xf32>
    %181 = tpu.matmul %180, %4, %cst_88 {dimension_numbers = #tpu.dot_dimension_numbers<[1], [0], [0], [1], [0, 0, 1, 1], [], []>} : vector<8x128xbf16>, vector<128x512xbf16>, vector<8x512xf32> -> vector<8x512xf32>
    %182 = arith.addf %179, %181 : vector<8x512xf32>
    %183 = vector.extract_strided_slice %182 {offsets = [0, 0], sizes = [8, 128], strides = [1, 1]} : vector<8x512xf32> to vector<8x128xf32>
    %184 = arith.negf %183 : vector<8x128xf32>
    %185 = math.exp %184 : vector<8x128xf32>
    %cst_89 = arith.constant 1.000000e+00 : f32
    %186 = vector.broadcast %cst_89 : f32 to vector<8x128xf32>
    %187 = arith.addf %186, %185 : vector<8x128xf32>
    %188 = arith.divf %186, %187 : vector<8x128xf32>
    %189 = vector.extract_strided_slice %182 {offsets = [0, 128], sizes = [8, 128], strides = [1, 1]} : vector<8x512xf32> to vector<8x128xf32>
    %190 = arith.negf %189 : vector<8x128xf32>
    %191 = math.exp %190 : vector<8x128xf32>
    %cst_90 = arith.constant 1.000000e+00 : f32
    %192 = vector.broadcast %cst_90 : f32 to vector<8x128xf32>
    %193 = arith.addf %192, %191 : vector<8x128xf32>
    %194 = arith.divf %192, %193 : vector<8x128xf32>
    %195 = vector.extract_strided_slice %182 {offsets = [0, 256], sizes = [8, 128], strides = [1, 1]} : vector<8x512xf32> to vector<8x128xf32>
    %196 = math.tanh %195 : vector<8x128xf32>
    %197 = vector.extract_strided_slice %182 {offsets = [0, 384], sizes = [8, 128], strides = [1, 1]} : vector<8x512xf32> to vector<8x128xf32>
    %198 = arith.negf %197 : vector<8x128xf32>
    %199 = math.exp %198 : vector<8x128xf32>
    %cst_91 = arith.constant 1.000000e+00 : f32
    %200 = vector.broadcast %cst_91 : f32 to vector<8x128xf32>
    %201 = arith.addf %200, %199 : vector<8x128xf32>
    %202 = arith.divf %200, %201 : vector<8x128xf32>
    %203 = arith.mulf %194, %176 : vector<8x128xf32>
    %204 = arith.mulf %188, %196 : vector<8x128xf32>
    %205 = arith.addf %203, %204 : vector<8x128xf32>
    %206 = math.tanh %205 : vector<8x128xf32>
    %207 = arith.mulf %202, %206 : vector<8x128xf32>
    %c0_92 = arith.constant 0 : index
    %c0_93 = arith.constant 0 : index
    %208 = vector.load %arg10[%c0_92, %c0_93] : memref<8x128xf32, #tpu.memory_space<vmem>>, vector<8x128xf32>
    tpu.vector_store %arg10[%c0_92, %c0_93], %207 {strides = array<i32>} : memref<8x128xf32, #tpu.memory_space<vmem>>, vector<8x128xf32>,
    %c0_94 = arith.constant 0 : index
    %c0_95 = arith.constant 0 : index
    %209 = vector.load %arg11[%c0_94, %c0_95] : memref<8x128xf32, #tpu.memory_space<vmem>>, vector<8x128xf32>
    tpu.vector_store %arg11[%c0_94, %c0_95], %205 {strides = array<i32>} : memref<8x128xf32, #tpu.memory_space<vmem>>, vector<8x128xf32>,
    %210 = arith.index_cast %174 : i32 to index
    %c0_96 = arith.constant 0 : index
    %c0_97 = arith.constant 0 : index
    %211 = vector.load %arg6[%210, %c0_96, %c0_97] : memref<8x8x128xf32, #tpu.memory_space<vmem>>, vector<1x8x128xf32>
    %212 = vector.shape_cast %211 : vector<1x8x128xf32> to vector<8x128xf32>
    %213 = vector.shape_cast %207 : vector<8x128xf32> to vector<1x8x128xf32>
    tpu.vector_store %arg6[%210, %c0_96, %c0_97], %213 {strides = array<i32>} : memref<8x8x128xf32, #tpu.memory_space<vmem>>, vector<1x8x128xf32>,
    %c5_i32 = arith.constant 5 : i32
    %c0_i32_98 = arith.constant 0 : i32
    %214 = arith.addi %c0_i32_98, %c5_i32 : i32
    %c0_99 = arith.constant 0 : index
    %c0_100 = arith.constant 0 : index
    %215 = vector.load %arg10[%c0_99, %c0_100] : memref<8x128xf32, #tpu.memory_space<vmem>>, vector<8x128xf32>
    %c0_101 = arith.constant 0 : index
    %c0_102 = arith.constant 0 : index
    %216 = vector.load %arg11[%c0_101, %c0_102] : memref<8x128xf32, #tpu.memory_space<vmem>>, vector<8x128xf32>
    %217 = arith.index_cast %214 : i32 to index
    %c0_103 = arith.constant 0 : index
    %c0_104 = arith.constant 0 : index
    %218 = vector.load %arg9[%217, %c0_103, %c0_104] : memref<8x8x512xf32, #tpu.memory_space<vmem>>, vector<1x8x512xf32>
    %219 = vector.shape_cast %218 : vector<1x8x512xf32> to vector<8x512xf32>
    %220 = arith.truncf %215 : vector<8x128xf32> to vector<8x128xbf16>
    %cst_105 = arith.constant dense<0.000000e+00> : vector<8x512xf32>
    %221 = tpu.matmul %220, %4, %cst_105 {dimension_numbers = #tpu.dot_dimension_numbers<[1], [0], [0], [1], [0, 0, 1, 1], [], []>} : vector<8x128xbf16>, vector<128x512xbf16>, vector<8x512xf32> -> vector<8x512xf32>
    %222 = arith.addf %219, %221 : vector<8x512xf32>
    %223 = vector.extract_strided_slice %222 {offsets = [0, 0], sizes = [8, 128], strides = [1, 1]} : vector<8x512xf32> to vector<8x128xf32>
    %224 = arith.negf %223 : vector<8x128xf32>
    %225 = math.exp %224 : vector<8x128xf32>
    %cst_106 = arith.constant 1.000000e+00 : f32
    %226 = vector.broadcast %cst_106 : f32 to vector<8x128xf32>
    %227 = arith.addf %226, %225 : vector<8x128xf32>
    %228 = arith.divf %226, %227 : vector<8x128xf32>
    %229 = vector.extract_strided_slice %222 {offsets = [0, 128], sizes = [8, 128], strides = [1, 1]} : vector<8x512xf32> to vector<8x128xf32>
    %230 = arith.negf %229 : vector<8x128xf32>
    %231 = math.exp %230 : vector<8x128xf32>
    %cst_107 = arith.constant 1.000000e+00 : f32
    %232 = vector.broadcast %cst_107 : f32 to vector<8x128xf32>
    %233 = arith.addf %232, %231 : vector<8x128xf32>
    %234 = arith.divf %232, %233 : vector<8x128xf32>
    %235 = vector.extract_strided_slice %222 {offsets = [0, 256], sizes = [8, 128], strides = [1, 1]} : vector<8x512xf32> to vector<8x128xf32>
    %236 = math.tanh %235 : vector<8x128xf32>
    %237 = vector.extract_strided_slice %222 {offsets = [0, 384], sizes = [8, 128], strides = [1, 1]} : vector<8x512xf32> to vector<8x128xf32>
    %238 = arith.negf %237 : vector<8x128xf32>
    %239 = math.exp %238 : vector<8x128xf32>
    %cst_108 = arith.constant 1.000000e+00 : f32
    %240 = vector.broadcast %cst_108 : f32 to vector<8x128xf32>
    %241 = arith.addf %240, %239 : vector<8x128xf32>
    %242 = arith.divf %240, %241 : vector<8x128xf32>
    %243 = arith.mulf %234, %216 : vector<8x128xf32>
    %244 = arith.mulf %228, %236 : vector<8x128xf32>
    %245 = arith.addf %243, %244 : vector<8x128xf32>
    %246 = math.tanh %245 : vector<8x128xf32>
    %247 = arith.mulf %242, %246 : vector<8x128xf32>
    %c0_109 = arith.constant 0 : index
    %c0_110 = arith.constant 0 : index
    %248 = vector.load %arg10[%c0_109, %c0_110] : memref<8x128xf32, #tpu.memory_space<vmem>>, vector<8x128xf32>
    tpu.vector_store %arg10[%c0_109, %c0_110], %247 {strides = array<i32>} : memref<8x128xf32, #tpu.memory_space<vmem>>, vector<8x128xf32>,
    %c0_111 = arith.constant 0 : index
    %c0_112 = arith.constant 0 : index
    %249 = vector.load %arg11[%c0_111, %c0_112] : memref<8x128xf32, #tpu.memory_space<vmem>>, vector<8x128xf32>
    tpu.vector_store %arg11[%c0_111, %c0_112], %245 {strides = array<i32>} : memref<8x128xf32, #tpu.memory_space<vmem>>, vector<8x128xf32>,
    %250 = arith.index_cast %214 : i32 to index
    %c0_113 = arith.constant 0 : index
    %c0_114 = arith.constant 0 : index
    %251 = vector.load %arg6[%250, %c0_113, %c0_114] : memref<8x8x128xf32, #tpu.memory_space<vmem>>, vector<1x8x128xf32>
    %252 = vector.shape_cast %251 : vector<1x8x128xf32> to vector<8x128xf32>
    %253 = vector.shape_cast %247 : vector<8x128xf32> to vector<1x8x128xf32>
    tpu.vector_store %arg6[%250, %c0_113, %c0_114], %253 {strides = array<i32>} : memref<8x8x128xf32, #tpu.memory_space<vmem>>, vector<1x8x128xf32>,
    %c6_i32 = arith.constant 6 : i32
    %c0_i32_115 = arith.constant 0 : i32
    %254 = arith.addi %c0_i32_115, %c6_i32 : i32
    %c0_116 = arith.constant 0 : index
    %c0_117 = arith.constant 0 : index
    %255 = vector.load %arg10[%c0_116, %c0_117] : memref<8x128xf32, #tpu.memory_space<vmem>>, vector<8x128xf32>
    %c0_118 = arith.constant 0 : index
    %c0_119 = arith.constant 0 : index
    %256 = vector.load %arg11[%c0_118, %c0_119] : memref<8x128xf32, #tpu.memory_space<vmem>>, vector<8x128xf32>
    %257 = arith.index_cast %254 : i32 to index
    %c0_120 = arith.constant 0 : index
    %c0_121 = arith.constant 0 : index
    %258 = vector.load %arg9[%257, %c0_120, %c0_121] : memref<8x8x512xf32, #tpu.memory_space<vmem>>, vector<1x8x512xf32>
    %259 = vector.shape_cast %258 : vector<1x8x512xf32> to vector<8x512xf32>
    %260 = arith.truncf %255 : vector<8x128xf32> to vector<8x128xbf16>
    %cst_122 = arith.constant dense<0.000000e+00> : vector<8x512xf32>
    %261 = tpu.matmul %260, %4, %cst_122 {dimension_numbers = #tpu.dot_dimension_numbers<[1], [0], [0], [1], [0, 0, 1, 1], [], []>} : vector<8x128xbf16>, vector<128x512xbf16>, vector<8x512xf32> -> vector<8x512xf32>
    %262 = arith.addf %259, %261 : vector<8x512xf32>
    %263 = vector.extract_strided_slice %262 {offsets = [0, 0], sizes = [8, 128], strides = [1, 1]} : vector<8x512xf32> to vector<8x128xf32>
    %264 = arith.negf %263 : vector<8x128xf32>
    %265 = math.exp %264 : vector<8x128xf32>
    %cst_123 = arith.constant 1.000000e+00 : f32
    %266 = vector.broadcast %cst_123 : f32 to vector<8x128xf32>
    %267 = arith.addf %266, %265 : vector<8x128xf32>
    %268 = arith.divf %266, %267 : vector<8x128xf32>
    %269 = vector.extract_strided_slice %262 {offsets = [0, 128], sizes = [8, 128], strides = [1, 1]} : vector<8x512xf32> to vector<8x128xf32>
    %270 = arith.negf %269 : vector<8x128xf32>
    %271 = math.exp %270 : vector<8x128xf32>
    %cst_124 = arith.constant 1.000000e+00 : f32
    %272 = vector.broadcast %cst_124 : f32 to vector<8x128xf32>
    %273 = arith.addf %272, %271 : vector<8x128xf32>
    %274 = arith.divf %272, %273 : vector<8x128xf32>
    %275 = vector.extract_strided_slice %262 {offsets = [0, 256], sizes = [8, 128], strides = [1, 1]} : vector<8x512xf32> to vector<8x128xf32>
    %276 = math.tanh %275 : vector<8x128xf32>
    %277 = vector.extract_strided_slice %262 {offsets = [0, 384], sizes = [8, 128], strides = [1, 1]} : vector<8x512xf32> to vector<8x128xf32>
    %278 = arith.negf %277 : vector<8x128xf32>
    %279 = math.exp %278 : vector<8x128xf32>
    %cst_125 = arith.constant 1.000000e+00 : f32
    %280 = vector.broadcast %cst_125 : f32 to vector<8x128xf32>
    %281 = arith.addf %280, %279 : vector<8x128xf32>
    %282 = arith.divf %280, %281 : vector<8x128xf32>
    %283 = arith.mulf %274, %256 : vector<8x128xf32>
    %284 = arith.mulf %268, %276 : vector<8x128xf32>
    %285 = arith.addf %283, %284 : vector<8x128xf32>
    %286 = math.tanh %285 : vector<8x128xf32>
    %287 = arith.mulf %282, %286 : vector<8x128xf32>
    %c0_126 = arith.constant 0 : index
    %c0_127 = arith.constant 0 : index
    %288 = vector.load %arg10[%c0_126, %c0_127] : memref<8x128xf32, #tpu.memory_space<vmem>>, vector<8x128xf32>
    tpu.vector_store %arg10[%c0_126, %c0_127], %287 {strides = array<i32>} : memref<8x128xf32, #tpu.memory_space<vmem>>, vector<8x128xf32>,
    %c0_128 = arith.constant 0 : index
    %c0_129 = arith.constant 0 : index
    %289 = vector.load %arg11[%c0_128, %c0_129] : memref<8x128xf32, #tpu.memory_space<vmem>>, vector<8x128xf32>
    tpu.vector_store %arg11[%c0_128, %c0_129], %285 {strides = array<i32>} : memref<8x128xf32, #tpu.memory_space<vmem>>, vector<8x128xf32>,
    %290 = arith.index_cast %254 : i32 to index
    %c0_130 = arith.constant 0 : index
    %c0_131 = arith.constant 0 : index
    %291 = vector.load %arg6[%290, %c0_130, %c0_131] : memref<8x8x128xf32, #tpu.memory_space<vmem>>, vector<1x8x128xf32>
    %292 = vector.shape_cast %291 : vector<1x8x128xf32> to vector<8x128xf32>
    %293 = vector.shape_cast %287 : vector<8x128xf32> to vector<1x8x128xf32>
    tpu.vector_store %arg6[%290, %c0_130, %c0_131], %293 {strides = array<i32>} : memref<8x8x128xf32, #tpu.memory_space<vmem>>, vector<1x8x128xf32>,
    %c7_i32 = arith.constant 7 : i32
    %c0_i32_132 = arith.constant 0 : i32
    %294 = arith.addi %c0_i32_132, %c7_i32 : i32
    %c0_133 = arith.constant 0 : index
    %c0_134 = arith.constant 0 : index
    %295 = vector.load %arg10[%c0_133, %c0_134] : memref<8x128xf32, #tpu.memory_space<vmem>>, vector<8x128xf32>
    %c0_135 = arith.constant 0 : index
    %c0_136 = arith.constant 0 : index
    %296 = vector.load %arg11[%c0_135, %c0_136] : memref<8x128xf32, #tpu.memory_space<vmem>>, vector<8x128xf32>
    %297 = arith.index_cast %294 : i32 to index
    %c0_137 = arith.constant 0 : index
    %c0_138 = arith.constant 0 : index
    %298 = vector.load %arg9[%297, %c0_137, %c0_138] : memref<8x8x512xf32, #tpu.memory_space<vmem>>, vector<1x8x512xf32>
    %299 = vector.shape_cast %298 : vector<1x8x512xf32> to vector<8x512xf32>
    %300 = arith.truncf %295 : vector<8x128xf32> to vector<8x128xbf16>
    %cst_139 = arith.constant dense<0.000000e+00> : vector<8x512xf32>
    %301 = tpu.matmul %300, %4, %cst_139 {dimension_numbers = #tpu.dot_dimension_numbers<[1], [0], [0], [1], [0, 0, 1, 1], [], []>} : vector<8x128xbf16>, vector<128x512xbf16>, vector<8x512xf32> -> vector<8x512xf32>
    %302 = arith.addf %299, %301 : vector<8x512xf32>
    %303 = vector.extract_strided_slice %302 {offsets = [0, 0], sizes = [8, 128], strides = [1, 1]} : vector<8x512xf32> to vector<8x128xf32>
    %304 = arith.negf %303 : vector<8x128xf32>
    %305 = math.exp %304 : vector<8x128xf32>
    %cst_140 = arith.constant 1.000000e+00 : f32
    %306 = vector.broadcast %cst_140 : f32 to vector<8x128xf32>
    %307 = arith.addf %306, %305 : vector<8x128xf32>
    %308 = arith.divf %306, %307 : vector<8x128xf32>
    %309 = vector.extract_strided_slice %302 {offsets = [0, 128], sizes = [8, 128], strides = [1, 1]} : vector<8x512xf32> to vector<8x128xf32>
    %310 = arith.negf %309 : vector<8x128xf32>
    %311 = math.exp %310 : vector<8x128xf32>
    %cst_141 = arith.constant 1.000000e+00 : f32
    %312 = vector.broadcast %cst_141 : f32 to vector<8x128xf32>
    %313 = arith.addf %312, %311 : vector<8x128xf32>
    %314 = arith.divf %312, %313 : vector<8x128xf32>
    %315 = vector.extract_strided_slice %302 {offsets = [0, 256], sizes = [8, 128], strides = [1, 1]} : vector<8x512xf32> to vector<8x128xf32>
    %316 = math.tanh %315 : vector<8x128xf32>
    %317 = vector.extract_strided_slice %302 {offsets = [0, 384], sizes = [8, 128], strides = [1, 1]} : vector<8x512xf32> to vector<8x128xf32>
    %318 = arith.negf %317 : vector<8x128xf32>
    %319 = math.exp %318 : vector<8x128xf32>
    %cst_142 = arith.constant 1.000000e+00 : f32
    %320 = vector.broadcast %cst_142 : f32 to vector<8x128xf32>
    %321 = arith.addf %320, %319 : vector<8x128xf32>
    %322 = arith.divf %320, %321 : vector<8x128xf32>
    %323 = arith.mulf %314, %296 : vector<8x128xf32>
    %324 = arith.mulf %308, %316 : vector<8x128xf32>
    %325 = arith.addf %323, %324 : vector<8x128xf32>
    %326 = math.tanh %325 : vector<8x128xf32>
    %327 = arith.mulf %322, %326 : vector<8x128xf32>
    %c0_143 = arith.constant 0 : index
    %c0_144 = arith.constant 0 : index
    %328 = vector.load %arg10[%c0_143, %c0_144] : memref<8x128xf32, #tpu.memory_space<vmem>>, vector<8x128xf32>
    tpu.vector_store %arg10[%c0_143, %c0_144], %327 {strides = array<i32>} : memref<8x128xf32, #tpu.memory_space<vmem>>, vector<8x128xf32>,
    %c0_145 = arith.constant 0 : index
    %c0_146 = arith.constant 0 : index
    %329 = vector.load %arg11[%c0_145, %c0_146] : memref<8x128xf32, #tpu.memory_space<vmem>>, vector<8x128xf32>
    tpu.vector_store %arg11[%c0_145, %c0_146], %325 {strides = array<i32>} : memref<8x128xf32, #tpu.memory_space<vmem>>, vector<8x128xf32>,
    %330 = arith.index_cast %294 : i32 to index
    %c0_147 = arith.constant 0 : index
    %c0_148 = arith.constant 0 : index
    %331 = vector.load %arg6[%330, %c0_147, %c0_148] : memref<8x8x128xf32, #tpu.memory_space<vmem>>, vector<1x8x128xf32>
    %332 = vector.shape_cast %331 : vector<1x8x128xf32> to vector<8x128xf32>
    %333 = vector.shape_cast %327 : vector<8x128xf32> to vector<1x8x128xf32>
    tpu.vector_store %arg6[%330, %c0_147, %c0_148], %333 {strides = array<i32>} : memref<8x8x128xf32, #tpu.memory_space<vmem>>, vector<1x8x128xf32>,
    %c8_i32 = arith.constant 8 : i32
    %c0_i32_149 = arith.constant 0 : i32
    %334 = arith.cmpi eq, %arg1, %c0_i32_149 : i32
    %335 = arith.extui %334 : i1 to i32
    %c0_i32_150 = arith.constant 0 : i32
    %336 = arith.cmpi ne, %335, %c0_i32_150 : i32
    scf.if %336 {
      %c0_151 = arith.constant 0 : index
      %c0_152 = arith.constant 0 : index
      %337 = vector.load %arg10[%c0_151, %c0_152] : memref<8x128xf32, #tpu.memory_space<vmem>>, vector<8x128xf32>
      %c0_153 = arith.constant 0 : index
      %c0_154 = arith.constant 0 : index
      %338 = vector.load %arg7[%c0_153, %c0_154] : memref<8x128xf32, #tpu.memory_space<vmem>>, vector<8x128xf32>
      tpu.vector_store %arg7[%c0_153, %c0_154], %337 {strides = array<i32>} : memref<8x128xf32, #tpu.memory_space<vmem>>, vector<8x128xf32>,
      %c0_155 = arith.constant 0 : index
      %c0_156 = arith.constant 0 : index
      %339 = vector.load %arg11[%c0_155, %c0_156] : memref<8x128xf32, #tpu.memory_space<vmem>>, vector<8x128xf32>
      %c0_157 = arith.constant 0 : index
      %c0_158 = arith.constant 0 : index
      %340 = vector.load %arg8[%c0_157, %c0_158] : memref<8x128xf32, #tpu.memory_space<vmem>>, vector<8x128xf32>
      tpu.vector_store %arg8[%c0_157, %c0_158], %339 {strides = array<i32>} : memref<8x128xf32, #tpu.memory_space<vmem>>, vector<8x128xf32>,
    } else {
    }
    return
  }
  func.func @transform_0(%arg0: i32, %arg1: i32) -> (i32, i32, i32) {
    %c0_i32 = arith.constant 0 : i32
    %c0_i32_0 = arith.constant 0 : i32
    return %arg1, %arg0, %c0_i32 : i32, i32, i32
  }
  func.func @transform_1(%arg0: i32, %arg1: i32) -> (i32, i32) {
    %c0_i32 = arith.constant 0 : i32
    %c0_i32_0 = arith.constant 0 : i32
    %c0_i32_1 = arith.constant 0 : i32
    return %c0_i32, %c0_i32_0 : i32, i32
  }
  func.func @transform_2(%arg0: i32, %arg1: i32) -> (i32, i32) {
    %c0_i32 = arith.constant 0 : i32
    %c0_i32_0 = arith.constant 0 : i32
    %c0_i32_1 = arith.constant 0 : i32
    return %c0_i32, %c0_i32_0 : i32, i32
  }
  func.func @transform_3(%arg0: i32, %arg1: i32) -> (i32, i32) {
    %c0_i32 = arith.constant 0 : i32
    %c0_i32_0 = arith.constant 0 : i32
    %c0_i32_1 = arith.constant 0 : i32
    return %c0_i32, %c0_i32_0 : i32, i32
  }
  func.func @transform_4(%arg0: i32, %arg1: i32) -> (i32, i32, i32) {
    %c0_i32 = arith.constant 0 : i32
    %c0_i32_0 = arith.constant 0 : i32
    return %arg1, %arg0, %c0_i32 : i32, i32, i32
  }
  func.func @transform_5(%arg0: i32, %arg1: i32) -> (i32, i32) {
    %c0_i32 = arith.constant 0 : i32
    %c0_i32_0 = arith.constant 0 : i32
    return %arg0, %c0_i32 : i32, i32
  }
  func.func @transform_6(%arg0: i32, %arg1: i32) -> (i32, i32) {
    %c0_i32 = arith.constant 0 : i32
    %c0_i32_0 = arith.constant 0 : i32
    return %arg0, %c0_i32 : i32, i32
  }
}

</mosaic_0001>

<llo_original>
// kernel: tpu_custom_call.1
$region0: #{tpu_custom_call.1}
  #allocation0 [shape = 'u32[]', space=smem, size = 0x4, offset = 0x4, fixed_abs, tag = 'smem constant byte address 0x4 - core index']
  #allocation1 [shape = 'u32[144,128]{1,0:T(1,128)}', space=vmem, size = 0x12000, scoped, tag = 'internal scratch']
  #allocation2 [shape = 'f32[8,8,512]{2,1,0:T(8,128)}', space=vmem, size = 0x20000, scoped, tag = 'scratch operand']
  #allocation3 [shape = 'f32[8,128]{1,0:T(8,128)}', space=vmem, size = 0x1000, scoped, tag = 'scratch operand']
  #allocation4 [shape = 'f32[8,128]{1,0:T(8,128)}', space=vmem, size = 0x1000, scoped, tag = 'scratch operand']
  %s0 = inlined_call_operand.hbm [shape: f32[8,8,16], index: 0, kind: input, shape index: {}]
  %s1 = inlined_call_operand.hbm [shape: bf16[16,512], index: 1, kind: input, shape index: {}]
  %s2 = inlined_call_operand.hbm [shape: bf16[128,512], index: 2, kind: input, shape index: {}]
  %s3 = inlined_call_operand.vmem [shape: f32[1,512], index: 3, kind: input, shape index: {}]
  %s4 = inlined_call_operand.hbm [shape: f32[8,8,128], index: 4, kind: output, shape index: {0}]
  %s5 = inlined_call_operand.hbm [shape: f32[8,128], index: 5, kind: output, shape index: {1}]
  %s6 = inlined_call_operand.hbm [shape: f32[8,128], index: 6, kind: output, shape index: {2}]
  %7 = xla_tuple %s4, %s5, %s6
  %s8 = sld [smem:[#allocation0]]
  $region62: #{tpu_custom_call.1} parent=0
    _
  %s10 = ssub.s32 1, %s8
  %s11 = scalar_select 0, %s10, %s8
  $region1: #{tpu_custom_call.1} parent=0
    #allocation5 [shape = 'u8[32768]{0}', space=vmem, size = 0x8000, scoped, tag = 'input window, operand 0, single buffered']
    #allocation6 [shape = 's32[1]{0}', space=sflag, size = 0x4, scoped, tag = 'scoped memory for tpu_custom_call.1']
    #allocation7 [shape = 's32[1]{0}', space=sflag, size = 0x4, scoped, tag = 'scoped memory for tpu_custom_call.1']
    #allocation8 [shape = 'u8[16384]{0}', space=vmem, size = 0x4000, scoped, tag = 'input window, operand 1, single buffered']
    #allocation9 [shape = 's32[1]{0}', space=sflag, size = 0x4, scoped, tag = 'scoped memory for tpu_custom_call.1']
    #allocation10 [shape = 'u8[131072]{0}', space=vmem, size = 0x20000, scoped, tag = 'input window, operand 2, single buffered']
    #allocation11 [shape = 'u8[32768]{0}', space=vmem, size = 0x8000, scoped, tag = 'output window, operand 0, single buffered']
    #allocation12 [shape = 'u8[4096]{0}', space=vmem, size = 0x1000, scoped, tag = 'output window, operand 1, single buffered']
    #allocation13 [shape = 's32[1]{0}', space=sflag, size = 0x4, scoped, tag = 'scoped memory for tpu_custom_call.1']
    #allocation14 [shape = 'u8[4096]{0}', space=vmem, size = 0x1000, scoped, tag = 'output window, operand 2, single buffered']
    %12 = vsyncpa [#allocation6], 0
    %13 = vsyncpa [#allocation9], 0
    %14 = vsyncpa [#allocation7], 0
    %15 = vsyncpa [#allocation13], 0
    // Predicated region
    $region2: #{tpu_custom_call.1} parent=1 // pred_check
      _
    $region3: #{tpu_custom_call.1} parent=1 // pred_check_branch
      %17 = sbr.rel (0) target = $region5
    $region4: #{tpu_custom_call.1} parent=1 // pred_region
      %s19 = ssub.s32 1024, 1024
      %20 = vsyncadd [#allocation6], %s19
      %s21 = sshll.u32 [#allocation5], 4
      %s22 = int_to_ptr.vmem [resolvable:$true] %s21
      %27 = dma.hbm_to_vmem [thread:$0]  %s0, 1024, %s22, [#allocation6], 128, 128, 8
    $region5: #{tpu_custom_call.1} parent=1 // pred_fallthru
      _
    // Predicated region
    $region6: #{tpu_custom_call.1} parent=1 // pred_check
      _
    $region7: #{tpu_custom_call.1} parent=1 // pred_check_branch
      %29 = sbr.rel (0) target = $region9
    $region8: #{tpu_custom_call.1} parent=1 // pred_region
      %s31 = ssub.s32 512, 512
      %32 = vsyncadd [#allocation9], %s31
      %s33 = sshll.u32 [#allocation8], 4
      %s34 = int_to_ptr.vmem [resolvable:$true] %s33
      %39 = dma.hbm_to_vmem [thread:$0]  %s1, 512, %s34, [#allocation9], 256, 256, 16
    $region9: #{tpu_custom_call.1} parent=1 // pred_fallthru
      _
    // Predicated region
    $region10: #{tpu_custom_call.1} parent=1 // pred_check
      _
    $region11: #{tpu_custom_call.1} parent=1 // pred_check_branch
      %41 = sbr.rel (0) target = $region13
    $region12: #{tpu_custom_call.1} parent=1 // pred_region
      %s43 = ssub.s32 4096, 4096
      %44 = vsyncadd [#allocation9], %s43
      %s45 = sshll.u32 [#allocation10], 4
      %s46 = int_to_ptr.vmem [resolvable:$true] %s45
      %51 = dma.hbm_to_vmem [thread:$0]  %s2, 4096, %s46, [#allocation9], 256, 256, 16
    $region13: #{tpu_custom_call.1} parent=1 // pred_fallthru
      _
    // Predicated region
    $region14: #{tpu_custom_call.1} parent=1 // pred_check
      _
    $region15: #{tpu_custom_call.1} parent=1 // pred_check_branch
      %53 = sbr.rel (0) target = $region17
    $region16: #{tpu_custom_call.1} parent=1 // pred_region
      _
    $region17: #{tpu_custom_call.1} parent=1 // pred_fallthru
      _
    // Predicated region
    $region18: #{tpu_custom_call.1} parent=1 // pred_check
      _
    $region19: #{tpu_custom_call.1} parent=1 // pred_check_branch
      %55 = sbr.rel (0) target = $region21
    $region20: #{tpu_custom_call.1} parent=1 // pred_region
      %56 = dma.done [#allocation6], 1024
    $region21: #{tpu_custom_call.1} parent=1 // pred_fallthru
      _
    // Predicated region
    $region22: #{tpu_custom_call.1} parent=1 // pred_check
      _
    $region23: #{tpu_custom_call.1} parent=1 // pred_check_branch
      %58 = sbr.rel (0) target = $region25
    $region24: #{tpu_custom_call.1} parent=1 // pred_region
      %59 = dma.done [#allocation9], 512
    $region25: #{tpu_custom_call.1} parent=1 // pred_fallthru
      _
    // Predicated region
    $region26: #{tpu_custom_call.1} parent=1 // pred_check
      _
    $region27: #{tpu_custom_call.1} parent=1 // pred_check_branch
      %61 = sbr.rel (0) target = $region29
    $region28: #{tpu_custom_call.1} parent=1 // pred_region
      %62 = dma.done [#allocation9], 4096
    $region29: #{tpu_custom_call.1} parent=1 // pred_fallthru
      _
    %p64 = scmp.eq.s32.totalorder 0, 0
    // Predicated region
    $region30: #{tpu_custom_call.1} parent=1 // pred_check
      %p65 = pneg %p64
    $region31: #{tpu_custom_call.1} parent=1 // pred_check_branch
      %67 = sbr.rel (%p65) target = $region33
    $region32: #{tpu_custom_call.1} parent=1 // pred_region
      %68 = vst [vmem:[#allocation3] sm:$0xff] 0.0
      %69 = vst [vmem:[#allocation4] sm:$0xff] 0.0
    $region33: #{tpu_custom_call.1} parent=1 // pred_fallthru
      _
    %v70 = vld [vmem:[#allocation8] sm:$0xff]
    %v71 = vld [vmem:[#allocation8 + $0x8] sm:$0xff]
    %v72 = vld [vmem:[#allocation8 + $0x10] sm:$0xff]
    %v73 = vld [vmem:[#allocation8 + $0x18] sm:$0xff]
    %v74 = vld [vmem:[#allocation10] sm:$0xff]
    %v75 = vld [vmem:[#allocation10 + $0x8] sm:$0xff]
    %v76 = vld [vmem:[#allocation10 + $0x10] sm:$0xff]
    %v77 = vld [vmem:[#allocation10 + $0x18] sm:$0xff]
    %v78 = vld [vmem:[#allocation10 + $0x20] sm:$0xff]
    %v79 = vld [vmem:[#allocation10 + $0x28] sm:$0xff]
    %v80 = vld [vmem:[#allocation10 + $0x30] sm:$0xff]
    %v81 = vld [vmem:[#allocation10 + $0x38] sm:$0xff]
    %v82 = vld [vmem:[#allocation10 + $0x40] sm:$0xff]
    %v83 = vld [vmem:[#allocation10 + $0x48] sm:$0xff]
    %v84 = vld [vmem:[#allocation10 + $0x50] sm:$0xff]
    %v85 = vld [vmem:[#allocation10 + $0x58] sm:$0xff]
    %v86 = vld [vmem:[#allocation10 + $0x60] sm:$0xff]
    %v87 = vld [vmem:[#allocation10 + $0x68] sm:$0xff]
    %v88 = vld [vmem:[#allocation10 + $0x70] sm:$0xff]
    %v89 = vld [vmem:[#allocation10 + $0x78] sm:$0xff]
    %v90 = vld [vmem:[#allocation10 + $0x80] sm:$0xff]
    %v91 = vld [vmem:[#allocation10 + $0x88] sm:$0xff]
    %v92 = vld [vmem:[#allocation10 + $0x90] sm:$0xff]
    %v93 = vld [vmem:[#allocation10 + $0x98] sm:$0xff]
    %v94 = vld [vmem:[#allocation10 + $0xa0] sm:$0xff]
    %v95 = vld [vmem:[#allocation10 + $0xa8] sm:$0xff]
    %v96 = vld [vmem:[#allocation10 + $0xb0] sm:$0xff]
    %v97 = vld [vmem:[#allocation10 + $0xb8] sm:$0xff]
    %v98 = vld [vmem:[#allocation10 + $0xc0] sm:$0xff]
    %v99 = vld [vmem:[#allocation10 + $0xc8] sm:$0xff]
    %v100 = vld [vmem:[#allocation10 + $0xd0] sm:$0xff]
    %v101 = vld [vmem:[#allocation10 + $0xd8] sm:$0xff]
    %v102 = vld [vmem:[#allocation10 + $0xe0] sm:$0xff]
    %v103 = vld [vmem:[#allocation10 + $0xe8] sm:$0xff]
    %v104 = vld [vmem:[#allocation10 + $0xf0] sm:$0xff]
    %v105 = vld [vmem:[#allocation10 + $0xf8] sm:$0xff]
    %v106 = vld [vmem:[%s3] sm:$0xf]
    %v107 = vld [vmem:[#allocation5] sm:$0xff]
    %v108 = vld [vmem:[#allocation5 + $0x8] sm:$0xff]
    %v109 = vld [vmem:[#allocation5 + $0x10] sm:$0xff]
    %v110 = vld [vmem:[#allocation5 + $0x18] sm:$0xff]
    %v111 = vld [vmem:[#allocation5 + $0x20] sm:$0xff]
    %v112 = vld [vmem:[#allocation5 + $0x28] sm:$0xff]
    %v113 = vld [vmem:[#allocation5 + $0x30] sm:$0xff]
    %v114 = vld [vmem:[#allocation5 + $0x38] sm:$0xff]
    %v115 = vpack.c.bf16 %v108, %v107
    %v116 = vpack.c.bf16 %v110, %v109
    %v117 = vpack.c.bf16 %v112, %v111
    %v118 = vpack.c.bf16 %v114, %v113
    %v120 = vlaneseq
    %v121 = vshrl.u32 %v120, 7
    %v122 = vsub.s32 0, %v121
    %v123 = vrot.slane %v106, %v122
    %v124 = vlaneseq
    %v125 = vshrl.u32 %v124, 7
    %v126 = vsub.s32 1, %v125
    %v127 = vrot.slane %v106, %v126
    %v128 = vlaneseq
    %v129 = vshrl.u32 %v128, 7
    %v130 = vsub.s32 2, %v129
    %v131 = vrot.slane %v106, %v130
    %v132 = vlaneseq
    %v133 = vshrl.u32 %v132, 7
    %v134 = vsub.s32 3, %v133
    %v135 = vrot.slane %v106, %v134
    %v144 = vunpack.c.l.b16 %v70
    %v145 = vunpack.c.h.b16 %v70
    %v146 = vunpack.c.l.b16 %v71
    %v147 = vunpack.c.h.b16 %v71
    %v148 = vunpack.c.l.b16 %v72
    %v149 = vunpack.c.h.b16 %v72
    %v150 = vunpack.c.l.b16 %v73
    %v151 = vunpack.c.h.b16 %v73
    %v152 = vpack.c.b16 %v148, %v144
    %v153 = vpack.c.b16 %v149, %v145
    %v154 = vpack.c.b16 %v150, %v146
    %v155 = vpack.c.b16 %v151, %v147
    %vm160 = vcmask 130048
    %v162 = vsel %vm160, %v115, 0
    %v165 = vsel %vm160, %v116, 0
    %v168 = vsel %vm160, %v117, 0
    %v171 = vsel %vm160, %v118, 0
    %173 = vmatprep.subr.bf16.mxu0 %v153
    %174 = vmatpush1.bf16.msra.mxu0 %v152
    %175 = vmatprep.subr.bf16.mxu0 0
    %176 = vmatpush1.bf16.msra.mxu0 0
    %177 = vmatprep.subr.bf16.mxu0 0
    %178 = vmatpush1.bf16.msra.mxu0 0
    %179 = vmatprep.subr.bf16.mxu0 0
    %180 = vmatpush1.bf16.msra.mxu0 0
    %181 = vmatprep.subr.bf16.mxu0 0
    %182 = vmatpush1.bf16.msra.mxu0 0
    %183 = vmatprep.subr.bf16.mxu0 0
    %184 = vmatpush1.bf16.msra.mxu0 0
    %185 = vmatprep.subr.bf16.mxu0 0
    %186 = vmatpush1.bf16.msra.mxu0 0
    %187 = vmatprep.subr.bf16.mxu0 0
    %188 = vmatpush1.bf16.msra.mxu0 0
    %189 = vmatprep.subr.bf16.mxu0 0
    %190 = vmatpush1.bf16.msra.mxu0 0
    %191 = vmatprep.subr.bf16.mxu0 0
    %192 = vmatpush1.bf16.msra.mxu0 0
    %193 = vmatprep.subr.bf16.mxu0 0
    %194 = vmatpush1.bf16.msra.mxu0 0
    %195 = vmatprep.subr.bf16.mxu0 0
    %196 = vmatpush1.bf16.msra.mxu0 0
    %197 = vmatprep.subr.bf16.mxu0 0
    %198 = vmatpush1.bf16.msra.mxu0 0
    %199 = vmatprep.subr.bf16.mxu0 0
    %200 = vmatpush1.bf16.msra.mxu0 0
    %201 = vmatprep.subr.bf16.mxu0 0
    %202 = vmatpush1.bf16.msra.mxu0 0
    %203 = vmatprep.subr.bf16.mxu0 0
    %204 = vmatpush1.bf16.msra.mxu0 0
    %205 = vmatprep.mubr.bf16.mxu0 0
    %206 = vmatmul.mubr.bf16.gmra.mrb[0].mxu0 %v162
    %v207 = vpop.f32.mrb[0].mxu0
    %v208 = vadd.f32 %v123, %v207
    %v209 = vpop.f32.mrb[0].mxu0
    %v210 = vadd.f32 %v127, %v209
    %v211 = vpop.f32.mrb[0].mxu0
    %v212 = vadd.f32 %v123, %v211
    %v213 = vpop.f32.mrb[0].mxu0
    %v214 = vadd.f32 %v127, %v213
    %215 = vmatprep.mubr.bf16.mxu0 0
    %216 = vmatmul.mubr.bf16.gmra.mrb[0].mxu0 %v165
    %v217 = vpop.f32.mrb[0].mxu0
    %v218 = vadd.f32 %v123, %v217
    %v219 = vpop.f32.mrb[0].mxu0
    %v220 = vadd.f32 %v127, %v219
    %v221 = vpop.f32.mrb[0].mxu0
    %v222 = vadd.f32 %v123, %v221
    %v223 = vpop.f32.mrb[0].mxu0
    %v224 = vadd.f32 %v127, %v223
    %225 = vmatprep.mubr.bf16.mxu0 0
    %226 = vmatmul.mubr.bf16.gmra.mrb[0].mxu0 %v168
    %v227 = vpop.f32.mrb[0].mxu0
    %v228 = vadd.f32 %v123, %v227
    %v229 = vpop.f32.mrb[0].mxu0
    %v230 = vadd.f32 %v127, %v229
    %v231 = vpop.f32.mrb[0].mxu0
    %v232 = vadd.f32 %v123, %v231
    %v233 = vpop.f32.mrb[0].mxu0
    %v234 = vadd.f32 %v127, %v233
    %235 = vmatprep.mubr.bf16.mxu0 0
    %236 = vmatmul.mubr.bf16.gmra.mrb[0].mxu0 %v171
    %v237 = vpop.f32.mrb[0].mxu0
    %v238 = vadd.f32 %v123, %v237
    %v239 = vpop.f32.mrb[0].mxu0
    %v240 = vadd.f32 %v127, %v239
    %v241 = vpop.f32.mrb[0].mxu0
    %v242 = vadd.f32 %v123, %v241
    %v243 = vpop.f32.mrb[0].mxu0
    %v244 = vadd.f32 %v127, %v243
    %245 = vdwg.mxu0
    %246 = vmatprep.subr.bf16.mxu0 %v155
    %247 = vmatpush1.bf16.msra.mxu0 %v154
    %248 = vmatprep.subr.bf16.mxu0 0
    %249 = vmatpush1.bf16.msra.mxu0 0
    %250 = vmatprep.subr.bf16.mxu0 0
    %251 = vmatpush1.bf16.msra.mxu0 0
    %252 = vmatprep.subr.bf16.mxu0 0
    %253 = vmatpush1.bf16.msra.mxu0 0
    %254 = vmatprep.subr.bf16.mxu0 0
    %255 = vmatpush1.bf16.msra.mxu0 0
    %256 = vmatprep.subr.bf16.mxu0 0
    %257 = vmatpush1.bf16.msra.mxu0 0
    %258 = vmatprep.subr.bf16.mxu0 0
    %259 = vmatpush1.bf16.msra.mxu0 0
    %260 = vmatprep.subr.bf16.mxu0 0
    %261 = vmatpush1.bf16.msra.mxu0 0
    %262 = vmatprep.subr.bf16.mxu0 0
    %263 = vmatpush1.bf16.msra.mxu0 0
    %264 = vmatprep.subr.bf16.mxu0 0
    %265 = vmatpush1.bf16.msra.mxu0 0
    %266 = vmatprep.subr.bf16.mxu0 0
    %267 = vmatpush1.bf16.msra.mxu0 0
    %268 = vmatprep.subr.bf16.mxu0 0
    %269 = vmatpush1.bf16.msra.mxu0 0
    %270 = vmatprep.subr.bf16.mxu0 0
    %271 = vmatpush1.bf16.msra.mxu0 0
    %272 = vmatprep.subr.bf16.mxu0 0
    %273 = vmatpush1.bf16.msra.mxu0 0
    %274 = vmatprep.subr.bf16.mxu0 0
    %275 = vmatpush1.bf16.msra.mxu0 0
    %276 = vmatprep.subr.bf16.mxu0 0
    %277 = vmatpush1.bf16.msra.mxu0 0
    %278 = vmatprep.mubr.bf16.mxu0 0
    %279 = vmatmul.mubr.bf16.gmra.mrb[0].mxu0 %v162
    %v280 = vpop.f32.mrb[0].mxu0
    %v281 = vadd.f32 %v131, %v280
    %v282 = vpop.f32.mrb[0].mxu0
    %v283 = vadd.f32 %v135, %v282
    %v284 = vpop.f32.mrb[0].mxu0
    %v285 = vadd.f32 %v131, %v284
    %v286 = vpop.f32.mrb[0].mxu0
    %v287 = vadd.f32 %v135, %v286
    %288 = vmatprep.mubr.bf16.mxu0 0
    %289 = vmatmul.mubr.bf16.gmra.mrb[0].mxu0 %v165
    %v290 = vpop.f32.mrb[0].mxu0
    %v291 = vadd.f32 %v131, %v290
    %v292 = vpop.f32.mrb[0].mxu0
    %v293 = vadd.f32 %v135, %v292
    %v294 = vpop.f32.mrb[0].mxu0
    %v295 = vadd.f32 %v131, %v294
    %v296 = vpop.f32.mrb[0].mxu0
    %v297 = vadd.f32 %v135, %v296
    %298 = vmatprep.mubr.bf16.mxu0 0
    %299 = vmatmul.mubr.bf16.gmra.mrb[0].mxu0 %v168
    %v300 = vpop.f32.mrb[0].mxu0
    %v301 = vadd.f32 %v131, %v300
    %v302 = vpop.f32.mrb[0].mxu0
    %v303 = vadd.f32 %v135, %v302
    %v304 = vpop.f32.mrb[0].mxu0
    %v305 = vadd.f32 %v131, %v304
    %v306 = vpop.f32.mrb[0].mxu0
    %v307 = vadd.f32 %v135, %v306
    %308 = vmatprep.mubr.bf16.mxu0 0
    %309 = vmatmul.mubr.bf16.gmra.mrb[0].mxu0 %v171
    %v310 = vpop.f32.mrb[0].mxu0
    %v311 = vadd.f32 %v131, %v310
    %v312 = vpop.f32.mrb[0].mxu0
    %v313 = vadd.f32 %v135, %v312
    %v314 = vpop.f32.mrb[0].mxu0
    %v315 = vadd.f32 %v131, %v314
    %v316 = vpop.f32.mrb[0].mxu0
    %v317 = vadd.f32 %v135, %v316
    %318 = vdwg.mxu0
    %319 = vst [vmem:[#allocation2] sm:$0xff] %v208
    %320 = vst [vmem:[#allocation2 + $0x8] sm:$0xff] %v210
    %321 = vst [vmem:[#allocation2 + $0x10] sm:$0xff] %v281
    %322 = vst [vmem:[#allocation2 + $0x18] sm:$0xff] %v283
    %323 = vst [vmem:[#allocation2 + $0x20] sm:$0xff] %v212
    %324 = vst [vmem:[#allocation2 + $0x28] sm:$0xff] %v214
    %325 = vst [vmem:[#allocation2 + $0x30] sm:$0xff] %v285
    %326 = vst [vmem:[#allocation2 + $0x38] sm:$0xff] %v287
    %327 = vst [vmem:[#allocation2 + $0x40] sm:$0xff] %v218
    %328 = vst [vmem:[#allocation2 + $0x48] sm:$0xff] %v220
    %329 = vst [vmem:[#allocation2 + $0x50] sm:$0xff] %v291
    %330 = vst [vmem:[#allocation2 + $0x58] sm:$0xff] %v293
    %331 = vst [vmem:[#allocation2 + $0x60] sm:$0xff] %v222
    %332 = vst [vmem:[#allocation2 + $0x68] sm:$0xff] %v224
    %333 = vst [vmem:[#allocation2 + $0x70] sm:$0xff] %v295
    %334 = vst [vmem:[#allocation2 + $0x78] sm:$0xff] %v297
    %335 = vst [vmem:[#allocation2 + $0x80] sm:$0xff] %v228
    %336 = vst [vmem:[#allocation2 + $0x88] sm:$0xff] %v230
    %337 = vst [vmem:[#allocation2 + $0x90] sm:$0xff] %v301
    %338 = vst [vmem:[#allocation2 + $0x98] sm:$0xff] %v303
    %339 = vst [vmem:[#allocation2 + $0xa0] sm:$0xff] %v232
    %340 = vst [vmem:[#allocation2 + $0xa8] sm:$0xff] %v234
    %341 = vst [vmem:[#allocation2 + $0xb0] sm:$0xff] %v305
    %342 = vst [vmem:[#allocation2 + $0xb8] sm:$0xff] %v307
    %343 = vst [vmem:[#allocation2 + $0xc0] sm:$0xff] %v238
    %344 = vst [vmem:[#allocation2 + $0xc8] sm:$0xff] %v240
    %345 = vst [vmem:[#allocation2 + $0xd0] sm:$0xff] %v311
    %346 = vst [vmem:[#allocation2 + $0xd8] sm:$0xff] %v313
    %347 = vst [vmem:[#allocation2 + $0xe0] sm:$0xff] %v242
    %348 = vst [vmem:[#allocation2 + $0xe8] sm:$0xff] %v244
    %349 = vst [vmem:[#allocation2 + $0xf0] sm:$0xff] %v315
    %350 = vst [vmem:[#allocation2 + $0xf8] sm:$0xff] %v317
    %v351 = vld [vmem:[#allocation3] sm:$0xff]
    %v352 = vld [vmem:[#allocation4] sm:$0xff]
    %v353 = vld [vmem:[#allocation2] sm:$0xff]
    %v354 = vld [vmem:[#allocation2 + $0x8] sm:$0xff]
    %v355 = vld [vmem:[#allocation2 + $0x10] sm:$0xff]
    %v356 = vld [vmem:[#allocation2 + $0x18] sm:$0xff]
    %v357 = vpack.c.bf16 %v351, %v351
    %v390 = vunpack.c.l.b16 %v74
    %v391 = vunpack.c.h.b16 %v74
    %v392 = vunpack.c.l.b16 %v75
    %v393 = vunpack.c.h.b16 %v75
    %v394 = vunpack.c.l.b16 %v76
    %v395 = vunpack.c.h.b16 %v76
    %v396 = vunpack.c.l.b16 %v77
    %v397 = vunpack.c.h.b16 %v77
    %v398 = vunpack.c.l.b16 %v78
    %v399 = vunpack.c.h.b16 %v78
    %v400 = vunpack.c.l.b16 %v79
    %v401 = vunpack.c.h.b16 %v79
    %v402 = vunpack.c.l.b16 %v80
    %v403 = vunpack.c.h.b16 %v80
    %v404 = vunpack.c.l.b16 %v81
    %v405 = vunpack.c.h.b16 %v81
    %v406 = vunpack.c.l.b16 %v82
    %v407 = vunpack.c.h.b16 %v82
    %v408 = vunpack.c.l.b16 %v83
    %v409 = vunpack.c.h.b16 %v83
    %v410 = vunpack.c.l.b16 %v84
    %v411 = vunpack.c.h.b16 %v84
    %v412 = vunpack.c.l.b16 %v85
    %v413 = vunpack.c.h.b16 %v85
    %v414 = vunpack.c.l.b16 %v86
    %v415 = vunpack.c.h.b16 %v86
    %v416 = vunpack.c.l.b16 %v87
    %v417 = vunpack.c.h.b16 %v87
    %v418 = vunpack.c.l.b16 %v88
    %v419 = vunpack.c.h.b16 %v88
    %v420 = vunpack.c.l.b16 %v89
    %v421 = vunpack.c.h.b16 %v89
    %v422 = vunpack.c.l.b16 %v90
    %v423 = vunpack.c.h.b16 %v90
    %v424 = vunpack.c.l.b16 %v91
    %v425 = vunpack.c.h.b16 %v91
    %v426 = vunpack.c.l.b16 %v92
    %v427 = vunpack.c.h.b16 %v92
    %v428 = vunpack.c.l.b16 %v93
    %v429 = vunpack.c.h.b16 %v93
    %v430 = vunpack.c.l.b16 %v94
    %v431 = vunpack.c.h.b16 %v94
    %v432 = vunpack.c.l.b16 %v95
    %v433 = vunpack.c.h.b16 %v95
    %v434 = vunpack.c.l.b16 %v96
    %v435 = vunpack.c.h.b16 %v96
    %v436 = vunpack.c.l.b16 %v97
    %v437 = vunpack.c.h.b16 %v97
    %v438 = vunpack.c.l.b16 %v98
    %v439 = vunpack.c.h.b16 %v98
    %v440 = vunpack.c.l.b16 %v99
    %v441 = vunpack.c.h.b16 %v99
    %v442 = vunpack.c.l.b16 %v100
    %v443 = vunpack.c.h.b16 %v100
    %v444 = vunpack.c.l.b16 %v101
    %v445 = vunpack.c.h.b16 %v101
    %v446 = vunpack.c.l.b16 %v102
    %v447 = vunpack.c.h.b16 %v102
    %v448 = vunpack.c.l.b16 %v103
    %v449 = vunpack.c.h.b16 %v103
    %v450 = vunpack.c.l.b16 %v104
    %v451 = vunpack.c.h.b16 %v104
    %v452 = vunpack.c.l.b16 %v105
    %v453 = vunpack.c.h.b16 %v105
    %v454 = vpack.c.b16 %v394, %v390
    %v455 = vpack.c.b16 %v395, %v391
    %v456 = vpack.c.b16 %v396, %v392
    %v457 = vpack.c.b16 %v397, %v393
    %v458 = vpack.c.b16 %v402, %v398
    %v459 = vpack.c.b16 %v403, %v399
    %v460 = vpack.c.b16 %v404, %v400
    %v461 = vpack.c.b16 %v405, %v401
    %v462 = vpack.c.b16 %v410, %v406
    %v463 = vpack.c.b16 %v411, %v407
    %v464 = vpack.c.b16 %v412, %v408
    %v465 = vpack.c.b16 %v413, %v409
    %v466 = vpack.c.b16 %v418, %v414
    %v467 = vpack.c.b16 %v419, %v415
    %v468 = vpack.c.b16 %v420, %v416
    %v469 = vpack.c.b16 %v421, %v417
    %v470 = vpack.c.b16 %v426, %v422
    %v471 = vpack.c.b16 %v427, %v423
    %v472 = vpack.c.b16 %v428, %v424
    %v473 = vpack.c.b16 %v429, %v425
    %v474 = vpack.c.b16 %v434, %v430
    %v475 = vpack.c.b16 %v435, %v431
    %v476 = vpack.c.b16 %v436, %v432
    %v477 = vpack.c.b16 %v437, %v433
    %v478 = vpack.c.b16 %v442, %v438
    %v479 = vpack.c.b16 %v443, %v439
    %v480 = vpack.c.b16 %v444, %v440
    %v481 = vpack.c.b16 %v445, %v441
    %v482 = vpack.c.b16 %v450, %v446
    %v483 = vpack.c.b16 %v451, %v447
    %v484 = vpack.c.b16 %v452, %v448
    %v485 = vpack.c.b16 %v453, %v449
    %518 = vmatprep.subr.bf16.mxu0 %v455
    %519 = vmatpush1.bf16.msra.mxu0 %v454
    %520 = vmatprep.subr.bf16.mxu0 %v459
    %521 = vmatpush1.bf16.msra.mxu0 %v458
    %522 = vmatprep.subr.bf16.mxu0 %v463
    %523 = vmatpush1.bf16.msra.mxu0 %v462
    %524 = vmatprep.subr.bf16.mxu0 %v467
    %525 = vmatpush1.bf16.msra.mxu0 %v466
    %526 = vmatprep.subr.bf16.mxu0 %v471
    %527 = vmatpush1.bf16.msra.mxu0 %v470
    %528 = vmatprep.subr.bf16.mxu0 %v475
    %529 = vmatpush1.bf16.msra.mxu0 %v474
    %530 = vmatprep.subr.bf16.mxu0 %v479
    %531 = vmatpush1.bf16.msra.mxu0 %v478
    %532 = vmatprep.subr.bf16.mxu0 %v483
    %533 = vmatpush1.bf16.msra.mxu0 %v482
    %534 = vmatprep.subr.bf16.mxu0 0
    %535 = vmatpush1.bf16.msra.mxu0 0
    %536 = vmatprep.subr.bf16.mxu0 0
    %537 = vmatpush1.bf16.msra.mxu0 0
    %538 = vmatprep.subr.bf16.mxu0 0
    %539 = vmatpush1.bf16.msra.mxu0 0
    %540 = vmatprep.subr.bf16.mxu0 0
    %541 = vmatpush1.bf16.msra.mxu0 0
    %542 = vmatprep.subr.bf16.mxu0 0
    %543 = vmatpush1.bf16.msra.mxu0 0
    %544 = vmatprep.subr.bf16.mxu0 0
    %545 = vmatpush1.bf16.msra.mxu0 0
    %546 = vmatprep.subr.bf16.mxu0 0
    %547 = vmatpush1.bf16.msra.mxu0 0
    %548 = vmatprep.subr.bf16.mxu0 0
    %549 = vmatpush1.bf16.msra.mxu0 0
    %550 = vmatprep.mubr.bf16.mxu0 0
    %551 = vmatmul.mubr.bf16.gmra.mrb[0].mxu0 %v357
    %v552 = vpop.f32.mrb[0].mxu0
    %v553 = vadd.f32 0.0, %v552
    %v554 = vpop.f32.mrb[0].mxu0
    %v555 = vadd.f32 0.0, %v554
    %v556 = vpop.f32.mrb[0].mxu0
    %v557 = vpop.f32.mrb[0].mxu0
    %558 = vdwg.mxu0
    %559 = vmatprep.subr.bf16.mxu0 %v457
    %560 = vmatpush1.bf16.msra.mxu0 %v456
    %561 = vmatprep.subr.bf16.mxu0 %v461
    %562 = vmatpush1.bf16.msra.mxu0 %v460
    %563 = vmatprep.subr.bf16.mxu0 %v465
    %564 = vmatpush1.bf16.msra.mxu0 %v464
    %565 = vmatprep.subr.bf16.mxu0 %v469
    %566 = vmatpush1.bf16.msra.mxu0 %v468
    %567 = vmatprep.subr.bf16.mxu0 %v473
    %568 = vmatpush1.bf16.msra.mxu0 %v472
    %569 = vmatprep.subr.bf16.mxu0 %v477
    %570 = vmatpush1.bf16.msra.mxu0 %v476
    %571 = vmatprep.subr.bf16.mxu0 %v481
    %572 = vmatpush1.bf16.msra.mxu0 %v480
    %573 = vmatprep.subr.bf16.mxu0 %v485
    %574 = vmatpush1.bf16.msra.mxu0 %v484
    %575 = vmatprep.subr.bf16.mxu0 0
    %576 = vmatpush1.bf16.msra.mxu0 0
    %577 = vmatprep.subr.bf16.mxu0 0
    %578 = vmatpush1.bf16.msra.mxu0 0
    %579 = vmatprep.subr.bf16.mxu0 0
    %580 = vmatpush1.bf16.msra.mxu0 0
    %581 = vmatprep.subr.bf16.mxu0 0
    %582 = vmatpush1.bf16.msra.mxu0 0
    %583 = vmatprep.subr.bf16.mxu0 0
    %584 = vmatpush1.bf16.msra.mxu0 0
    %585 = vmatprep.subr.bf16.mxu0 0
    %586 = vmatpush1.bf16.msra.mxu0 0
    %587 = vmatprep.subr.bf16.mxu0 0
    %588 = vmatpush1.bf16.msra.mxu0 0
    %589 = vmatprep.subr.bf16.mxu0 0
    %590 = vmatpush1.bf16.msra.mxu0 0
    %591 = vmatprep.mubr.bf16.mxu0 0
    %592 = vmatmul.mubr.bf16.gmra.mrb[0].mxu0 %v357
    %v593 = vpop.f32.mrb[0].mxu0
    %v594 = vadd.f32 0.0, %v593
    %v595 = vpop.f32.mrb[0].mxu0
    %v596 = vadd.f32 0.0, %v595
    %v597 = vpop.f32.mrb[0].mxu0
    %v598 = vpop.f32.mrb[0].mxu0
    %599 = vdwg.mxu0
    %v600 = vadd.f32 %v353, %v553
    %v601 = vadd.f32 %v354, %v555
    %v602 = vadd.f32 %v355, %v594
    %v603 = vadd.f32 %v356, %v596
    %v604 = vxor.u32 %v600, 2147483648
    %v605 = vmul.f32 %v604, 1.442695
    %v606 = vpow.pop %v605
    %v607 = vadd.f32 %v606, 1.0
    %v608 = vrcp.pop %v607
    %v609 = vmul.f32 1.0, %v608
    %v610 = vxor.u32 %v601, 2147483648
    %v611 = vmul.f32 %v610, 1.442695
    %v612 = vpow.pop %v611
    %v613 = vadd.f32 %v612, 1.0
    %v614 = vrcp.pop %v613
    %v615 = vmul.f32 1.0, %v614
    %v616 = vtanh.pop %v602
    %v617 = vxor.u32 %v603, 2147483648
    %v618 = vmul.f32 %v617, 1.442695
    %v619 = vpow.pop %v618
    %v620 = vadd.f32 %v619, 1.0
    %v621 = vrcp.pop %v620
    %v622 = vmul.f32 1.0, %v621
    %v623 = vmul.f32 %v615, %v352
    %v624 = vmul.f32 %v609, %v616
    %v625 = vadd.f32 %v623, %v624
    %v626 = vtanh.pop %v625
    %v627 = vmul.f32 %v622, %v626
    %628 = vst [vmem:[#allocation3] sm:$0xff] %v627
    %629 = vst [vmem:[#allocation4] sm:$0xff] %v625
    %630 = vst [vmem:[#allocation11] sm:$0xff] %v627
    %v631 = vld [vmem:[#allocation3] sm:$0xff]
    %v632 = vld [vmem:[#allocation4] sm:$0xff]
    %s633 = scalar_lea.vmem [#allocation2], 32
    %v634 = vld [vmem:[%s633] sm:$0xff]
    %v635 = vld [vmem:[%s633 + $0x8] sm:$0xff]
    %v636 = vld [vmem:[%s633 + $0x10] sm:$0xff]
    %v637 = vld [vmem:[%s633 + $0x18] sm:$0xff]
    %v638 = vpack.c.bf16 %v631, %v631
    %639 = vmatprep.subr.bf16.mxu0 %v455
    %640 = vmatpush1.bf16.msra.mxu0 %v454
    %641 = vmatprep.subr.bf16.mxu0 %v459
    %642 = vmatpush1.bf16.msra.mxu0 %v458
    %643 = vmatprep.subr.bf16.mxu0 %v463
    %644 = vmatpush1.bf16.msra.mxu0 %v462
    %645 = vmatprep.subr.bf16.mxu0 %v467
    %646 = vmatpush1.bf16.msra.mxu0 %v466
    %647 = vmatprep.subr.bf16.mxu0 %v471
    %648 = vmatpush1.bf16.msra.mxu0 %v470
    %649 = vmatprep.subr.bf16.mxu0 %v475
    %650 = vmatpush1.bf16.msra.mxu0 %v474
    %651 = vmatprep.subr.bf16.mxu0 %v479
    %652 = vmatpush1.bf16.msra.mxu0 %v478
    %653 = vmatprep.subr.bf16.mxu0 %v483
    %654 = vmatpush1.bf16.msra.mxu0 %v482
    %655 = vmatprep.subr.bf16.mxu0 0
    %656 = vmatpush1.bf16.msra.mxu0 0
    %657 = vmatprep.subr.bf16.mxu0 0
    %658 = vmatpush1.bf16.msra.mxu0 0
    %659 = vmatprep.subr.bf16.mxu0 0
    %660 = vmatpush1.bf16.msra.mxu0 0
    %661 = vmatprep.subr.bf16.mxu0 0
    %662 = vmatpush1.bf16.msra.mxu0 0
    %663 = vmatprep.subr.bf16.mxu0 0
    %664 = vmatpush1.bf16.msra.mxu0 0
    %665 = vmatprep.subr.bf16.mxu0 0
    %666 = vmatpush1.bf16.msra.mxu0 0
    %667 = vmatprep.subr.bf16.mxu0 0
    %668 = vmatpush1.bf16.msra.mxu0 0
    %669 = vmatprep.subr.bf16.mxu0 0
    %670 = vmatpush1.bf16.msra.mxu0 0
    %671 = vmatprep.mubr.bf16.mxu0 0
    %672 = vmatmul.mubr.bf16.gmra.mrb[0].mxu0 %v638
    %v673 = vpop.f32.mrb[0].mxu0
    %v674 = vadd.f32 0.0, %v673
    %v675 = vpop.f32.mrb[0].mxu0
    %v676 = vadd.f32 0.0, %v675
    %v677 = vpop.f32.mrb[0].mxu0
    %v678 = vpop.f32.mrb[0].mxu0
    %679 = vdwg.mxu0
    %680 = vmatprep.subr.bf16.mxu0 %v457
    %681 = vmatpush1.bf16.msra.mxu0 %v456
    %682 = vmatprep.subr.bf16.mxu0 %v461
    %683 = vmatpush1.bf16.msra.mxu0 %v460
    %684 = vmatprep.subr.bf16.mxu0 %v465
    %685 = vmatpush1.bf16.msra.mxu0 %v464
    %686 = vmatprep.subr.bf16.mxu0 %v469
    %687 = vmatpush1.bf16.msra.mxu0 %v468
    %688 = vmatprep.subr.bf16.mxu0 %v473
    %689 = vmatpush1.bf16.msra.mxu0 %v472
    %690 = vmatprep.subr.bf16.mxu0 %v477
    %691 = vmatpush1.bf16.msra.mxu0 %v476
    %692 = vmatprep.subr.bf16.mxu0 %v481
    %693 = vmatpush1.bf16.msra.mxu0 %v480
    %694 = vmatprep.subr.bf16.mxu0 %v485
    %695 = vmatpush1.bf16.msra.mxu0 %v484
    %696 = vmatprep.subr.bf16.mxu0 0
    %697 = vmatpush1.bf16.msra.mxu0 0
    %698 = vmatprep.subr.bf16.mxu0 0
    %699 = vmatpush1.bf16.msra.mxu0 0
    %700 = vmatprep.subr.bf16.mxu0 0
    %701 = vmatpush1.bf16.msra.mxu0 0
    %702 = vmatprep.subr.bf16.mxu0 0
    %703 = vmatpush1.bf16.msra.mxu0 0
    %704 = vmatprep.subr.bf16.mxu0 0
    %705 = vmatpush1.bf16.msra.mxu0 0
    %706 = vmatprep.subr.bf16.mxu0 0
    %707 = vmatpush1.bf16.msra.mxu0 0
    %708 = vmatprep.subr.bf16.mxu0 0
    %709 = vmatpush1.bf16.msra.mxu0 0
    %710 = vmatprep.subr.bf16.mxu0 0
    %711 = vmatpush1.bf16.msra.mxu0 0
    %712 = vmatprep.mubr.bf16.mxu0 0
    %713 = vmatmul.mubr.bf16.gmra.mrb[0].mxu0 %v638
    %v714 = vpop.f32.mrb[0].mxu0
    %v715 = vadd.f32 0.0, %v714
    %v716 = vpop.f32.mrb[0].mxu0
    %v717 = vadd.f32 0.0, %v716
    %v718 = vpop.f32.mrb[0].mxu0
    %v719 = vpop.f32.mrb[0].mxu0
    %720 = vdwg.mxu0
    %v721 = vadd.f32 %v634, %v674
    %v722 = vadd.f32 %v635, %v676
    %v723 = vadd.f32 %v636, %v715
    %v724 = vadd.f32 %v637, %v717
    %v725 = vxor.u32 %v721, 2147483648
    %v726 = vmul.f32 %v725, 1.442695
    %v727 = vpow.pop %v726
    %v728 = vadd.f32 %v727, 1.0
    %v729 = vrcp.pop %v728
    %v730 = vmul.f32 1.0, %v729
    %v731 = vxor.u32 %v722, 2147483648
    %v732 = vmul.f32 %v731, 1.442695
    %v733 = vpow.pop %v732
    %v734 = vadd.f32 %v733, 1.0
    %v735 = vrcp.pop %v734
    %v736 = vmul.f32 1.0, %v735
    %v737 = vtanh.pop %v723
    %v738 = vxor.u32 %v724, 2147483648
    %v739 = vmul.f32 %v738, 1.442695
    %v740 = vpow.pop %v739
    %v741 = vadd.f32 %v740, 1.0
    %v742 = vrcp.pop %v741
    %v743 = vmul.f32 1.0, %v742
    %v744 = vmul.f32 %v736, %v632
    %v745 = vmul.f32 %v730, %v737
    %v746 = vadd.f32 %v744, %v745
    %v747 = vtanh.pop %v746
    %v748 = vmul.f32 %v743, %v747
    %749 = vst [vmem:[#allocation3] sm:$0xff] %v748
    %750 = vst [vmem:[#allocation4] sm:$0xff] %v746
    %s751 = scalar_lea.vmem [#allocation11], 8
    %752 = vst [vmem:[%s751] sm:$0xff] %v748
    %v753 = vld [vmem:[#allocation3] sm:$0xff]
    %v754 = vld [vmem:[#allocation4] sm:$0xff]
    %s755 = scalar_lea.vmem [#allocation2], 64
    %v756 = vld [vmem:[%s755] sm:$0xff]
    %v757 = vld [vmem:[%s755 + $0x8] sm:$0xff]
    %v758 = vld [vmem:[%s755 + $0x10] sm:$0xff]
    %v759 = vld [vmem:[%s755 + $0x18] sm:$0xff]
    %v760 = vpack.c.bf16 %v753, %v753
    %761 = vmatprep.subr.bf16.mxu0 %v455
    %762 = vmatpush1.bf16.msra.mxu0 %v454
    %763 = vmatprep.subr.bf16.mxu0 %v459
    %764 = vmatpush1.bf16.msra.mxu0 %v458
    %765 = vmatprep.subr.bf16.mxu0 %v463
    %766 = vmatpush1.bf16.msra.mxu0 %v462
    %767 = vmatprep.subr.bf16.mxu0 %v467
    %768 = vmatpush1.bf16.msra.mxu0 %v466
    %769 = vmatprep.subr.bf16.mxu0 %v471
    %770 = vmatpush1.bf16.msra.mxu0 %v470
    %771 = vmatprep.subr.bf16.mxu0 %v475
    %772 = vmatpush1.bf16.msra.mxu0 %v474
    %773 = vmatprep.subr.bf16.mxu0 %v479
    %774 = vmatpush1.bf16.msra.mxu0 %v478
    %775 = vmatprep.subr.bf16.mxu0 %v483
    %776 = vmatpush1.bf16.msra.mxu0 %v482
    %777 = vmatprep.subr.bf16.mxu0 0
    %778 = vmatpush1.bf16.msra.mxu0 0
    %779 = vmatprep.subr.bf16.mxu0 0
    %780 = vmatpush1.bf16.msra.mxu0 0
    %781 = vmatprep.subr.bf16.mxu0 0
    %782 = vmatpush1.bf16.msra.mxu0 0
    %783 = vmatprep.subr.bf16.mxu0 0
    %784 = vmatpush1.bf16.msra.mxu0 0
    %785 = vmatprep.subr.bf16.mxu0 0
    %786 = vmatpush1.bf16.msra.mxu0 0
    %787 = vmatprep.subr.bf16.mxu0 0
    %788 = vmatpush1.bf16.msra.mxu0 0
    %789 = vmatprep.subr.bf16.mxu0 0
    %790 = vmatpush1.bf16.msra.mxu0 0
    %791 = vmatprep.subr.bf16.mxu0 0
    %792 = vmatpush1.bf16.msra.mxu0 0
    %793 = vmatprep.mubr.bf16.mxu0 0
    %794 = vmatmul.mubr.bf16.gmra.mrb[0].mxu0 %v760
    %v795 = vpop.f32.mrb[0].mxu0
    %v796 = vadd.f32 0.0, %v795
    %v797 = vpop.f32.mrb[0].mxu0
    %v798 = vadd.f32 0.0, %v797
    %v799 = vpop.f32.mrb[0].mxu0
    %v800 = vpop.f32.mrb[0].mxu0
    %801 = vdwg.mxu0
    %802 = vmatprep.subr.bf16.mxu0 %v457
    %803 = vmatpush1.bf16.msra.mxu0 %v456
    %804 = vmatprep.subr.bf16.mxu0 %v461
    %805 = vmatpush1.bf16.msra.mxu0 %v460
    %806 = vmatprep.subr.bf16.mxu0 %v465
    %807 = vmatpush1.bf16.msra.mxu0 %v464
    %808 = vmatprep.subr.bf16.mxu0 %v469
    %809 = vmatpush1.bf16.msra.mxu0 %v468
    %810 = vmatprep.subr.bf16.mxu0 %v473
    %811 = vmatpush1.bf16.msra.mxu0 %v472
    %812 = vmatprep.subr.bf16.mxu0 %v477
    %813 = vmatpush1.bf16.msra.mxu0 %v476
    %814 = vmatprep.subr.bf16.mxu0 %v481
    %815 = vmatpush1.bf16.msra.mxu0 %v480
    %816 = vmatprep.subr.bf16.mxu0 %v485
    %817 = vmatpush1.bf16.msra.mxu0 %v484
    %818 = vmatprep.subr.bf16.mxu0 0
    %819 = vmatpush1.bf16.msra.mxu0 0
    %820 = vmatprep.subr.bf16.mxu0 0
    %821 = vmatpush1.bf16.msra.mxu0 0
    %822 = vmatprep.subr.bf16.mxu0 0
    %823 = vmatpush1.bf16.msra.mxu0 0
    %824 = vmatprep.subr.bf16.mxu0 0
    %825 = vmatpush1.bf16.msra.mxu0 0
    %826 = vmatprep.subr.bf16.mxu0 0
    %827 = vmatpush1.bf16.msra.mxu0 0
    %828 = vmatprep.subr.bf16.mxu0 0
    %829 = vmatpush1.bf16.msra.mxu0 0
    %830 = vmatprep.subr.bf16.mxu0 0
    %831 = vmatpush1.bf16.msra.mxu0 0
    %832 = vmatprep.subr.bf16.mxu0 0
    %833 = vmatpush1.bf16.msra.mxu0 0
    %834 = vmatprep.mubr.bf16.mxu0 0
    %835 = vmatmul.mubr.bf16.gmra.mrb[0].mxu0 %v760
    %v836 = vpop.f32.mrb[0].mxu0
    %v837 = vadd.f32 0.0, %v836
    %v838 = vpop.f32.mrb[0].mxu0
    %v839 = vadd.f32 0.0, %v838
    %v840 = vpop.f32.mrb[0].mxu0
    %v841 = vpop.f32.mrb[0].mxu0
    %842 = vdwg.mxu0
    %v843 = vadd.f32 %v756, %v796
    %v844 = vadd.f32 %v757, %v798
    %v845 = vadd.f32 %v758, %v837
    %v846 = vadd.f32 %v759, %v839
    %v847 = vxor.u32 %v843, 2147483648
    %v848 = vmul.f32 %v847, 1.442695
    %v849 = vpow.pop %v848
    %v850 = vadd.f32 %v849, 1.0
    %v851 = vrcp.pop %v850
    %v852 = vmul.f32 1.0, %v851
    %v853 = vxor.u32 %v844, 2147483648
    %v854 = vmul.f32 %v853, 1.442695
    %v855 = vpow.pop %v854
    %v856 = vadd.f32 %v855, 1.0
    %v857 = vrcp.pop %v856
    %v858 = vmul.f32 1.0, %v857
    %v859 = vtanh.pop %v845
    %v860 = vxor.u32 %v846, 2147483648
    %v861 = vmul.f32 %v860, 1.442695
    %v862 = vpow.pop %v861
    %v863 = vadd.f32 %v862, 1.0
    %v864 = vrcp.pop %v863
    %v865 = vmul.f32 1.0, %v864
    %v866 = vmul.f32 %v858, %v754
    %v867 = vmul.f32 %v852, %v859
    %v868 = vadd.f32 %v866, %v867
    %v869 = vtanh.pop %v868
    %v870 = vmul.f32 %v865, %v869
    %871 = vst [vmem:[#allocation3] sm:$0xff] %v870
    %872 = vst [vmem:[#allocation4] sm:$0xff] %v868
    %s873 = scalar_lea.vmem [#allocation11], 16
    %874 = vst [vmem:[%s873] sm:$0xff] %v870
    %v875 = vld [vmem:[#allocation3] sm:$0xff]
    %v876 = vld [vmem:[#allocation4] sm:$0xff]
    %s877 = scalar_lea.vmem [#allocation2], 96
    %v878 = vld [vmem:[%s877] sm:$0xff]
    %v879 = vld [vmem:[%s877 + $0x8] sm:$0xff]
    %v880 = vld [vmem:[%s877 + $0x10] sm:$0xff]
    %v881 = vld [vmem:[%s877 + $0x18] sm:$0xff]
    %v882 = vpack.c.bf16 %v875, %v875
    %883 = vmatprep.subr.bf16.mxu0 %v455
    %884 = vmatpush1.bf16.msra.mxu0 %v454
    %885 = vmatprep.subr.bf16.mxu0 %v459
    %886 = vmatpush1.bf16.msra.mxu0 %v458
    %887 = vmatprep.subr.bf16.mxu0 %v463
    %888 = vmatpush1.bf16.msra.mxu0 %v462
    %889 = vmatprep.subr.bf16.mxu0 %v467
    %890 = vmatpush1.bf16.msra.mxu0 %v466
    %891 = vmatprep.subr.bf16.mxu0 %v471
    %892 = vmatpush1.bf16.msra.mxu0 %v470
    %893 = vmatprep.subr.bf16.mxu0 %v475
    %894 = vmatpush1.bf16.msra.mxu0 %v474
    %895 = vmatprep.subr.bf16.mxu0 %v479
    %896 = vmatpush1.bf16.msra.mxu0 %v478
    %897 = vmatprep.subr.bf16.mxu0 %v483
    %898 = vmatpush1.bf16.msra.mxu0 %v482
    %899 = vmatprep.subr.bf16.mxu0 0
    %900 = vmatpush1.bf16.msra.mxu0 0
    %901 = vmatprep.subr.bf16.mxu0 0
    %902 = vmatpush1.bf16.msra.mxu0 0
    %903 = vmatprep.subr.bf16.mxu0 0
    %904 = vmatpush1.bf16.msra.mxu0 0
    %905 = vmatprep.subr.bf16.mxu0 0
    %906 = vmatpush1.bf16.msra.mxu0 0
    %907 = vmatprep.subr.bf16.mxu0 0
    %908 = vmatpush1.bf16.msra.mxu0 0
    %909 = vmatprep.subr.bf16.mxu0 0
    %910 = vmatpush1.bf16.msra.mxu0 0
    %911 = vmatprep.subr.bf16.mxu0 0
    %912 = vmatpush1.bf16.msra.mxu0 0
    %913 = vmatprep.subr.bf16.mxu0 0
    %914 = vmatpush1.bf16.msra.mxu0 0
    %915 = vmatprep.mubr.bf16.mxu0 0
    %916 = vmatmul.mubr.bf16.gmra.mrb[0].mxu0 %v882
    %v917 = vpop.f32.mrb[0].mxu0
    %v918 = vadd.f32 0.0, %v917
    %v919 = vpop.f32.mrb[0].mxu0
    %v920 = vadd.f32 0.0, %v919
    %v921 = vpop.f32.mrb[0].mxu0
    %v922 = vpop.f32.mrb[0].mxu0
    %923 = vdwg.mxu0
    %924 = vmatprep.subr.bf16.mxu0 %v457
    %925 = vmatpush1.bf16.msra.mxu0 %v456
    %926 = vmatprep.subr.bf16.mxu0 %v461
    %927 = vmatpush1.bf16.msra.mxu0 %v460
    %928 = vmatprep.subr.bf16.mxu0 %v465
    %929 = vmatpush1.bf16.msra.mxu0 %v464
    %930 = vmatprep.subr.bf16.mxu0 %v469
    %931 = vmatpush1.bf16.msra.mxu0 %v468
    %932 = vmatprep.subr.bf16.mxu0 %v473
    %933 = vmatpush1.bf16.msra.mxu0 %v472
    %934 = vmatprep.subr.bf16.mxu0 %v477
    %935 = vmatpush1.bf16.msra.mxu0 %v476
    %936 = vmatprep.subr.bf16.mxu0 %v481
    %937 = vmatpush1.bf16.msra.mxu0 %v480
    %938 = vmatprep.subr.bf16.mxu0 %v485
    %939 = vmatpush1.bf16.msra.mxu0 %v484
    %940 = vmatprep.subr.bf16.mxu0 0
    %941 = vmatpush1.bf16.msra.mxu0 0
    %942 = vmatprep.subr.bf16.mxu0 0
    %943 = vmatpush1.bf16.msra.mxu0 0
    %944 = vmatprep.subr.bf16.mxu0 0
    %945 = vmatpush1.bf16.msra.mxu0 0
    %946 = vmatprep.subr.bf16.mxu0 0
    %947 = vmatpush1.bf16.msra.mxu0 0
    %948 = vmatprep.subr.bf16.mxu0 0
    %949 = vmatpush1.bf16.msra.mxu0 0
    %950 = vmatprep.subr.bf16.mxu0 0
    %951 = vmatpush1.bf16.msra.mxu0 0
    %952 = vmatprep.subr.bf16.mxu0 0
    %953 = vmatpush1.bf16.msra.mxu0 0
    %954 = vmatprep.subr.bf16.mxu0 0
    %955 = vmatpush1.bf16.msra.mxu0 0
    %956 = vmatprep.mubr.bf16.mxu0 0
    %957 = vmatmul.mubr.bf16.gmra.mrb[0].mxu0 %v882
    %v958 = vpop.f32.mrb[0].mxu0
    %v959 = vadd.f32 0.0, %v958
    %v960 = vpop.f32.mrb[0].mxu0
    %v961 = vadd.f32 0.0, %v960
    %v962 = vpop.f32.mrb[0].mxu0
    %v963 = vpop.f32.mrb[0].mxu0
    %964 = vdwg.mxu0
    %v965 = vadd.f32 %v878, %v918
    %v966 = vadd.f32 %v879, %v920
    %v967 = vadd.f32 %v880, %v959
    %v968 = vadd.f32 %v881, %v961
    %v969 = vxor.u32 %v965, 2147483648
    %v970 = vmul.f32 %v969, 1.442695
    %v971 = vpow.pop %v970
    %v972 = vadd.f32 %v971, 1.0
    %v973 = vrcp.pop %v972
    %v974 = vmul.f32 1.0, %v973
    %v975 = vxor.u32 %v966, 2147483648
    %v976 = vmul.f32 %v975, 1.442695
    %v977 = vpow.pop %v976
    %v978 = vadd.f32 %v977, 1.0
    %v979 = vrcp.pop %v978
    %v980 = vmul.f32 1.0, %v979
    %v981 = vtanh.pop %v967
    %v982 = vxor.u32 %v968, 2147483648
    %v983 = vmul.f32 %v982, 1.442695
    %v984 = vpow.pop %v983
    %v985 = vadd.f32 %v984, 1.0
    %v986 = vrcp.pop %v985
    %v987 = vmul.f32 1.0, %v986
    %v988 = vmul.f32 %v980, %v876
    %v989 = vmul.f32 %v974, %v981
    %v990 = vadd.f32 %v988, %v989
    %v991 = vtanh.pop %v990
    %v992 = vmul.f32 %v987, %v991
    %993 = vst [vmem:[#allocation3] sm:$0xff] %v992
    %994 = vst [vmem:[#allocation4] sm:$0xff] %v990
    %s995 = scalar_lea.vmem [#allocation11], 24
    %996 = vst [vmem:[%s995] sm:$0xff] %v992
    %v997 = vld [vmem:[#allocation3] sm:$0xff]
    %v998 = vld [vmem:[#allocation4] sm:$0xff]
    %s999 = scalar_lea.vmem [#allocation2], 128
    %v1000 = vld [vmem:[%s999] sm:$0xff]
    %v1001 = vld [vmem:[%s999 + $0x8] sm:$0xff]
    %v1002 = vld [vmem:[%s999 + $0x10] sm:$0xff]
    %v1003 = vld [vmem:[%s999 + $0x18] sm:$0xff]
    %v1004 = vpack.c.bf16 %v997, %v997
    %1005 = vmatprep.subr.bf16.mxu0 %v455
    %1006 = vmatpush1.bf16.msra.mxu0 %v454
    %1007 = vmatprep.subr.bf16.mxu0 %v459
    %1008 = vmatpush1.bf16.msra.mxu0 %v458
    %1009 = vmatprep.subr.bf16.mxu0 %v463
    %1010 = vmatpush1.bf16.msra.mxu0 %v462
    %1011 = vmatprep.subr.bf16.mxu0 %v467
    %1012 = vmatpush1.bf16.msra.mxu0 %v466
    %1013 = vmatprep.subr.bf16.mxu0 %v471
    %1014 = vmatpush1.bf16.msra.mxu0 %v470
    %1015 = vmatprep.subr.bf16.mxu0 %v475
    %1016 = vmatpush1.bf16.msra.mxu0 %v474
    %1017 = vmatprep.subr.bf16.mxu0 %v479
    %1018 = vmatpush1.bf16.msra.mxu0 %v478
    %1019 = vmatprep.subr.bf16.mxu0 %v483
    %1020 = vmatpush1.bf16.msra.mxu0 %v482
    %1021 = vmatprep.subr.bf16.mxu0 0
    %1022 = vmatpush1.bf16.msra.mxu0 0
    %1023 = vmatprep.subr.bf16.mxu0 0
    %1024 = vmatpush1.bf16.msra.mxu0 0
    %1025 = vmatprep.subr.bf16.mxu0 0
    %1026 = vmatpush1.bf16.msra.mxu0 0
    %1027 = vmatprep.subr.bf16.mxu0 0
    %1028 = vmatpush1.bf16.msra.mxu0 0
    %1029 = vmatprep.subr.bf16.mxu0 0
    %1030 = vmatpush1.bf16.msra.mxu0 0
    %1031 = vmatprep.subr.bf16.mxu0 0
    %1032 = vmatpush1.bf16.msra.mxu0 0
    %1033 = vmatprep.subr.bf16.mxu0 0
    %1034 = vmatpush1.bf16.msra.mxu0 0
    %1035 = vmatprep.subr.bf16.mxu0 0
    %1036 = vmatpush1.bf16.msra.mxu0 0
    %1037 = vmatprep.mubr.bf16.mxu0 0
    %1038 = vmatmul.mubr.bf16.gmra.mrb[0].mxu0 %v1004
    %v1039 = vpop.f32.mrb[0].mxu0
    %v1040 = vadd.f32 0.0, %v1039
    %v1041 = vpop.f32.mrb[0].mxu0
    %v1042 = vadd.f32 0.0, %v1041
    %v1043 = vpop.f32.mrb[0].mxu0
    %v1044 = vpop.f32.mrb[0].mxu0
    %1045 = vdwg.mxu0
    %1046 = vmatprep.subr.bf16.mxu0 %v457
    %1047 = vmatpush1.bf16.msra.mxu0 %v456
    %1048 = vmatprep.subr.bf16.mxu0 %v461
    %1049 = vmatpush1.bf16.msra.mxu0 %v460
    %1050 = vmatprep.subr.bf16.mxu0 %v465
    %1051 = vmatpush1.bf16.msra.mxu0 %v464
    %1052 = vmatprep.subr.bf16.mxu0 %v469
    %1053 = vmatpush1.bf16.msra.mxu0 %v468
    %1054 = vmatprep.subr.bf16.mxu0 %v473
    %1055 = vmatpush1.bf16.msra.mxu0 %v472
    %1056 = vmatprep.subr.bf16.mxu0 %v477
    %1057 = vmatpush1.bf16.msra.mxu0 %v476
    %1058 = vmatprep.subr.bf16.mxu0 %v481
    %1059 = vmatpush1.bf16.msra.mxu0 %v480
    %1060 = vmatprep.subr.bf16.mxu0 %v485
    %1061 = vmatpush1.bf16.msra.mxu0 %v484
    %1062 = vmatprep.subr.bf16.mxu0 0
    %1063 = vmatpush1.bf16.msra.mxu0 0
    %1064 = vmatprep.subr.bf16.mxu0 0
    %1065 = vmatpush1.bf16.msra.mxu0 0
    %1066 = vmatprep.subr.bf16.mxu0 0
    %1067 = vmatpush1.bf16.msra.mxu0 0
    %1068 = vmatprep.subr.bf16.mxu0 0
    %1069 = vmatpush1.bf16.msra.mxu0 0
    %1070 = vmatprep.subr.bf16.mxu0 0
    %1071 = vmatpush1.bf16.msra.mxu0 0
    %1072 = vmatprep.subr.bf16.mxu0 0
    %1073 = vmatpush1.bf16.msra.mxu0 0
    %1074 = vmatprep.subr.bf16.mxu0 0
    %1075 = vmatpush1.bf16.msra.mxu0 0
    %1076 = vmatprep.subr.bf16.mxu0 0
    %1077 = vmatpush1.bf16.msra.mxu0 0
    %1078 = vmatprep.mubr.bf16.mxu0 0
    %1079 = vmatmul.mubr.bf16.gmra.mrb[0].mxu0 %v1004
    %v1080 = vpop.f32.mrb[0].mxu0
    %v1081 = vadd.f32 0.0, %v1080
    %v1082 = vpop.f32.mrb[0].mxu0
    %v1083 = vadd.f32 0.0, %v1082
    %v1084 = vpop.f32.mrb[0].mxu0
    %v1085 = vpop.f32.mrb[0].mxu0
    %1086 = vdwg.mxu0
    %v1087 = vadd.f32 %v1000, %v1040
    %v1088 = vadd.f32 %v1001, %v1042
    %v1089 = vadd.f32 %v1002, %v1081
    %v1090 = vadd.f32 %v1003, %v1083
    %v1091 = vxor.u32 %v1087, 2147483648
    %v1092 = vmul.f32 %v1091, 1.442695
    %v1093 = vpow.pop %v1092
    %v1094 = vadd.f32 %v1093, 1.0
    %v1095 = vrcp.pop %v1094
    %v1096 = vmul.f32 1.0, %v1095
    %v1097 = vxor.u32 %v1088, 2147483648
    %v1098 = vmul.f32 %v1097, 1.442695
    %v1099 = vpow.pop %v1098
    %v1100 = vadd.f32 %v1099, 1.0
    %v1101 = vrcp.pop %v1100
    %v1102 = vmul.f32 1.0, %v1101
    %v1103 = vtanh.pop %v1089
    %v1104 = vxor.u32 %v1090, 2147483648
    %v1105 = vmul.f32 %v1104, 1.442695
    %v1106 = vpow.pop %v1105
    %v1107 = vadd.f32 %v1106, 1.0
    %v1108 = vrcp.pop %v1107
    %v1109 = vmul.f32 1.0, %v1108
    %v1110 = vmul.f32 %v1102, %v998
    %v1111 = vmul.f32 %v1096, %v1103
    %v1112 = vadd.f32 %v1110, %v1111
    %v1113 = vtanh.pop %v1112
    %v1114 = vmul.f32 %v1109, %v1113
    %1115 = vst [vmem:[#allocation3] sm:$0xff] %v1114
    %1116 = vst [vmem:[#allocation4] sm:$0xff] %v1112
    %s1117 = scalar_lea.vmem [#allocation11], 32
    %1118 = vst [vmem:[%s1117] sm:$0xff] %v1114
    %v1119 = vld [vmem:[#allocation3] sm:$0xff]
    %v1120 = vld [vmem:[#allocation4] sm:$0xff]
    %s1121 = scalar_lea.vmem [#allocation2], 160
    %v1122 = vld [vmem:[%s1121] sm:$0xff]
    %v1123 = vld [vmem:[%s1121 + $0x8] sm:$0xff]
    %v1124 = vld [vmem:[%s1121 + $0x10] sm:$0xff]
    %v1125 = vld [vmem:[%s1121 + $0x18] sm:$0xff]
    %v1126 = vpack.c.bf16 %v1119, %v1119
    %1127 = vmatprep.subr.bf16.mxu0 %v455
    %1128 = vmatpush1.bf16.msra.mxu0 %v454
    %1129 = vmatprep.subr.bf16.mxu0 %v459
    %1130 = vmatpush1.bf16.msra.mxu0 %v458
    %1131 = vmatprep.subr.bf16.mxu0 %v463
    %1132 = vmatpush1.bf16.msra.mxu0 %v462
    %1133 = vmatprep.subr.bf16.mxu0 %v467
    %1134 = vmatpush1.bf16.msra.mxu0 %v466
    %1135 = vmatprep.subr.bf16.mxu0 %v471
    %1136 = vmatpush1.bf16.msra.mxu0 %v470
    %1137 = vmatprep.subr.bf16.mxu0 %v475
    %1138 = vmatpush1.bf16.msra.mxu0 %v474
    %1139 = vmatprep.subr.bf16.mxu0 %v479
    %1140 = vmatpush1.bf16.msra.mxu0 %v478
    %1141 = vmatprep.subr.bf16.mxu0 %v483
    %1142 = vmatpush1.bf16.msra.mxu0 %v482
    %1143 = vmatprep.subr.bf16.mxu0 0
    %1144 = vmatpush1.bf16.msra.mxu0 0
    %1145 = vmatprep.subr.bf16.mxu0 0
    %1146 = vmatpush1.bf16.msra.mxu0 0
    %1147 = vmatprep.subr.bf16.mxu0 0
    %1148 = vmatpush1.bf16.msra.mxu0 0
    %1149 = vmatprep.subr.bf16.mxu0 0
    %1150 = vmatpush1.bf16.msra.mxu0 0
    %1151 = vmatprep.subr.bf16.mxu0 0
    %1152 = vmatpush1.bf16.msra.mxu0 0
    %1153 = vmatprep.subr.bf16.mxu0 0
    %1154 = vmatpush1.bf16.msra.mxu0 0
    %1155 = vmatprep.subr.bf16.mxu0 0
    %1156 = vmatpush1.bf16.msra.mxu0 0
    %1157 = vmatprep.subr.bf16.mxu0 0
    %1158 = vmatpush1.bf16.msra.mxu0 0
    %1159 = vmatprep.mubr.bf16.mxu0 0
    %1160 = vmatmul.mubr.bf16.gmra.mrb[0].mxu0 %v1126
    %v1161 = vpop.f32.mrb[0].mxu0
    %v1162 = vadd.f32 0.0, %v1161
    %v1163 = vpop.f32.mrb[0].mxu0
    %v1164 = vadd.f32 0.0, %v1163
    %v1165 = vpop.f32.mrb[0].mxu0
    %v1166 = vpop.f32.mrb[0].mxu0
    %1167 = vdwg.mxu0
    %1168 = vmatprep.subr.bf16.mxu0 %v457
    %1169 = vmatpush1.bf16.msra.mxu0 %v456
    %1170 = vmatprep.subr.bf16.mxu0 %v461
    %1171 = vmatpush1.bf16.msra.mxu0 %v460
    %1172 = vmatprep.subr.bf16.mxu0 %v465
    %1173 = vmatpush1.bf16.msra.mxu0 %v464
    %1174 = vmatprep.subr.bf16.mxu0 %v469
    %1175 = vmatpush1.bf16.msra.mxu0 %v468
    %1176 = vmatprep.subr.bf16.mxu0 %v473
    %1177 = vmatpush1.bf16.msra.mxu0 %v472
    %1178 = vmatprep.subr.bf16.mxu0 %v477
    %1179 = vmatpush1.bf16.msra.mxu0 %v476
    %1180 = vmatprep.subr.bf16.mxu0 %v481
    %1181 = vmatpush1.bf16.msra.mxu0 %v480
    %1182 = vmatprep.subr.bf16.mxu0 %v485
    %1183 = vmatpush1.bf16.msra.mxu0 %v484
    %1184 = vmatprep.subr.bf16.mxu0 0
    %1185 = vmatpush1.bf16.msra.mxu0 0
    %1186 = vmatprep.subr.bf16.mxu0 0
    %1187 = vmatpush1.bf16.msra.mxu0 0
    %1188 = vmatprep.subr.bf16.mxu0 0
    %1189 = vmatpush1.bf16.msra.mxu0 0
    %1190 = vmatprep.subr.bf16.mxu0 0
    %1191 = vmatpush1.bf16.msra.mxu0 0
    %1192 = vmatprep.subr.bf16.mxu0 0
    %1193 = vmatpush1.bf16.msra.mxu0 0
    %1194 = vmatprep.subr.bf16.mxu0 0
    %1195 = vmatpush1.bf16.msra.mxu0 0
    %1196 = vmatprep.subr.bf16.mxu0 0
    %1197 = vmatpush1.bf16.msra.mxu0 0
    %1198 = vmatprep.subr.bf16.mxu0 0
    %1199 = vmatpush1.bf16.msra.mxu0 0
    %1200 = vmatprep.mubr.bf16.mxu0 0
    %1201 = vmatmul.mubr.bf16.gmra.mrb[0].mxu0 %v1126
    %v1202 = vpop.f32.mrb[0].mxu0
    %v1203 = vadd.f32 0.0, %v1202
    %v1204 = vpop.f32.mrb[0].mxu0
    %v1205 = vadd.f32 0.0, %v1204
    %v1206 = vpop.f32.mrb[0].mxu0
    %v1207 = vpop.f32.mrb[0].mxu0
    %1208 = vdwg.mxu0
    %v1209 = vadd.f32 %v1122, %v1162
    %v1210 = vadd.f32 %v1123, %v1164
    %v1211 = vadd.f32 %v1124, %v1203
    %v1212 = vadd.f32 %v1125, %v1205
    %v1213 = vxor.u32 %v1209, 2147483648
    %v1214 = vmul.f32 %v1213, 1.442695
    %v1215 = vpow.pop %v1214
    %v1216 = vadd.f32 %v1215, 1.0
    %v1217 = vrcp.pop %v1216
    %v1218 = vmul.f32 1.0, %v1217
    %v1219 = vxor.u32 %v1210, 2147483648
    %v1220 = vmul.f32 %v1219, 1.442695
    %v1221 = vpow.pop %v1220
    %v1222 = vadd.f32 %v1221, 1.0
    %v1223 = vrcp.pop %v1222
    %v1224 = vmul.f32 1.0, %v1223
    %v1225 = vtanh.pop %v1211
    %v1226 = vxor.u32 %v1212, 2147483648
    %v1227 = vmul.f32 %v1226, 1.442695
    %v1228 = vpow.pop %v1227
    %v1229 = vadd.f32 %v1228, 1.0
    %v1230 = vrcp.pop %v1229
    %v1231 = vmul.f32 1.0, %v1230
    %v1232 = vmul.f32 %v1224, %v1120
    %v1233 = vmul.f32 %v1218, %v1225
    %v1234 = vadd.f32 %v1232, %v1233
    %v1235 = vtanh.pop %v1234
    %v1236 = vmul.f32 %v1231, %v1235
    %1237 = vst [vmem:[#allocation3] sm:$0xff] %v1236
    %1238 = vst [vmem:[#allocation4] sm:$0xff] %v1234
    %s1239 = scalar_lea.vmem [#allocation11], 40
    %1240 = vst [vmem:[%s1239] sm:$0xff] %v1236
    %v1241 = vld [vmem:[#allocation3] sm:$0xff]
    %v1242 = vld [vmem:[#allocation4] sm:$0xff]
    %s1243 = scalar_lea.vmem [#allocation2], 192
    %v1244 = vld [vmem:[%s1243] sm:$0xff]
    %v1245 = vld [vmem:[%s1243 + $0x8] sm:$0xff]
    %v1246 = vld [vmem:[%s1243 + $0x10] sm:$0xff]
    %v1247 = vld [vmem:[%s1243 + $0x18] sm:$0xff]
    %v1248 = vpack.c.bf16 %v1241, %v1241
    %1249 = vmatprep.subr.bf16.mxu0 %v455
    %1250 = vmatpush1.bf16.msra.mxu0 %v454
    %1251 = vmatprep.subr.bf16.mxu0 %v459
    %1252 = vmatpush1.bf16.msra.mxu0 %v458
    %1253 = vmatprep.subr.bf16.mxu0 %v463
    %1254 = vmatpush1.bf16.msra.mxu0 %v462
    %1255 = vmatprep.subr.bf16.mxu0 %v467
    %1256 = vmatpush1.bf16.msra.mxu0 %v466
    %1257 = vmatprep.subr.bf16.mxu0 %v471
    %1258 = vmatpush1.bf16.msra.mxu0 %v470
    %1259 = vmatprep.subr.bf16.mxu0 %v475
    %1260 = vmatpush1.bf16.msra.mxu0 %v474
    %1261 = vmatprep.subr.bf16.mxu0 %v479
    %1262 = vmatpush1.bf16.msra.mxu0 %v478
    %1263 = vmatprep.subr.bf16.mxu0 %v483
    %1264 = vmatpush1.bf16.msra.mxu0 %v482
    %1265 = vmatprep.subr.bf16.mxu0 0
    %1266 = vmatpush1.bf16.msra.mxu0 0
    %1267 = vmatprep.subr.bf16.mxu0 0
    %1268 = vmatpush1.bf16.msra.mxu0 0
    %1269 = vmatprep.subr.bf16.mxu0 0
    %1270 = vmatpush1.bf16.msra.mxu0 0
    %1271 = vmatprep.subr.bf16.mxu0 0
    %1272 = vmatpush1.bf16.msra.mxu0 0
    %1273 = vmatprep.subr.bf16.mxu0 0
    %1274 = vmatpush1.bf16.msra.mxu0 0
    %1275 = vmatprep.subr.bf16.mxu0 0
    %1276 = vmatpush1.bf16.msra.mxu0 0
    %1277 = vmatprep.subr.bf16.mxu0 0
    %1278 = vmatpush1.bf16.msra.mxu0 0
    %1279 = vmatprep.subr.bf16.mxu0 0
    %1280 = vmatpush1.bf16.msra.mxu0 0
    %1281 = vmatprep.mubr.bf16.mxu0 0
    %1282 = vmatmul.mubr.bf16.gmra.mrb[0].mxu0 %v1248
    %v1283 = vpop.f32.mrb[0].mxu0
    %v1284 = vadd.f32 0.0, %v1283
    %v1285 = vpop.f32.mrb[0].mxu0
    %v1286 = vadd.f32 0.0, %v1285
    %v1287 = vpop.f32.mrb[0].mxu0
    %v1288 = vpop.f32.mrb[0].mxu0
    %1289 = vdwg.mxu0
    %1290 = vmatprep.subr.bf16.mxu0 %v457
    %1291 = vmatpush1.bf16.msra.mxu0 %v456
    %1292 = vmatprep.subr.bf16.mxu0 %v461
    %1293 = vmatpush1.bf16.msra.mxu0 %v460
    %1294 = vmatprep.subr.bf16.mxu0 %v465
    %1295 = vmatpush1.bf16.msra.mxu0 %v464
    %1296 = vmatprep.subr.bf16.mxu0 %v469
    %1297 = vmatpush1.bf16.msra.mxu0 %v468
    %1298 = vmatprep.subr.bf16.mxu0 %v473
    %1299 = vmatpush1.bf16.msra.mxu0 %v472
    %1300 = vmatprep.subr.bf16.mxu0 %v477
    %1301 = vmatpush1.bf16.msra.mxu0 %v476
    %1302 = vmatprep.subr.bf16.mxu0 %v481
    %1303 = vmatpush1.bf16.msra.mxu0 %v480
    %1304 = vmatprep.subr.bf16.mxu0 %v485
    %1305 = vmatpush1.bf16.msra.mxu0 %v484
    %1306 = vmatprep.subr.bf16.mxu0 0
    %1307 = vmatpush1.bf16.msra.mxu0 0
    %1308 = vmatprep.subr.bf16.mxu0 0
    %1309 = vmatpush1.bf16.msra.mxu0 0
    %1310 = vmatprep.subr.bf16.mxu0 0
    %1311 = vmatpush1.bf16.msra.mxu0 0
    %1312 = vmatprep.subr.bf16.mxu0 0
    %1313 = vmatpush1.bf16.msra.mxu0 0
    %1314 = vmatprep.subr.bf16.mxu0 0
    %1315 = vmatpush1.bf16.msra.mxu0 0
    %1316 = vmatprep.subr.bf16.mxu0 0
    %1317 = vmatpush1.bf16.msra.mxu0 0
    %1318 = vmatprep.subr.bf16.mxu0 0
    %1319 = vmatpush1.bf16.msra.mxu0 0
    %1320 = vmatprep.subr.bf16.mxu0 0
    %1321 = vmatpush1.bf16.msra.mxu0 0
    %1322 = vmatprep.mubr.bf16.mxu0 0
    %1323 = vmatmul.mubr.bf16.gmra.mrb[0].mxu0 %v1248
    %v1324 = vpop.f32.mrb[0].mxu0
    %v1325 = vadd.f32 0.0, %v1324
    %v1326 = vpop.f32.mrb[0].mxu0
    %v1327 = vadd.f32 0.0, %v1326
    %v1328 = vpop.f32.mrb[0].mxu0
    %v1329 = vpop.f32.mrb[0].mxu0
    %1330 = vdwg.mxu0
    %v1331 = vadd.f32 %v1244, %v1284
    %v1332 = vadd.f32 %v1245, %v1286
    %v1333 = vadd.f32 %v1246, %v1325
    %v1334 = vadd.f32 %v1247, %v1327
    %v1335 = vxor.u32 %v1331, 2147483648
    %v1336 = vmul.f32 %v1335, 1.442695
    %v1337 = vpow.pop %v1336
    %v1338 = vadd.f32 %v1337, 1.0
    %v1339 = vrcp.pop %v1338
    %v1340 = vmul.f32 1.0, %v1339
    %v1341 = vxor.u32 %v1332, 2147483648
    %v1342 = vmul.f32 %v1341, 1.442695
    %v1343 = vpow.pop %v1342
    %v1344 = vadd.f32 %v1343, 1.0
    %v1345 = vrcp.pop %v1344
    %v1346 = vmul.f32 1.0, %v1345
    %v1347 = vtanh.pop %v1333
    %v1348 = vxor.u32 %v1334, 2147483648
    %v1349 = vmul.f32 %v1348, 1.442695
    %v1350 = vpow.pop %v1349
    %v1351 = vadd.f32 %v1350, 1.0
    %v1352 = vrcp.pop %v1351
    %v1353 = vmul.f32 1.0, %v1352
    %v1354 = vmul.f32 %v1346, %v1242
    %v1355 = vmul.f32 %v1340, %v1347
    %v1356 = vadd.f32 %v1354, %v1355
    %v1357 = vtanh.pop %v1356
    %v1358 = vmul.f32 %v1353, %v1357
    %1359 = vst [vmem:[#allocation3] sm:$0xff] %v1358
    %1360 = vst [vmem:[#allocation4] sm:$0xff] %v1356
    %s1361 = scalar_lea.vmem [#allocation11], 48
    %1362 = vst [vmem:[%s1361] sm:$0xff] %v1358
    %v1363 = vld [vmem:[#allocation3] sm:$0xff]
    %v1364 = vld [vmem:[#allocation4] sm:$0xff]
    %s1365 = scalar_lea.vmem [#allocation2], 224
    %v1366 = vld [vmem:[%s1365] sm:$0xff]
    %v1367 = vld [vmem:[%s1365 + $0x8] sm:$0xff]
    %v1368 = vld [vmem:[%s1365 + $0x10] sm:$0xff]
    %v1369 = vld [vmem:[%s1365 + $0x18] sm:$0xff]
    %v1370 = vpack.c.bf16 %v1363, %v1363
    %1371 = vmatprep.subr.bf16.mxu0 %v455
    %1372 = vmatpush1.bf16.msra.mxu0 %v454
    %1373 = vmatprep.subr.bf16.mxu0 %v459
    %1374 = vmatpush1.bf16.msra.mxu0 %v458
    %1375 = vmatprep.subr.bf16.mxu0 %v463
    %1376 = vmatpush1.bf16.msra.mxu0 %v462
    %1377 = vmatprep.subr.bf16.mxu0 %v467
    %1378 = vmatpush1.bf16.msra.mxu0 %v466
    %1379 = vmatprep.subr.bf16.mxu0 %v471
    %1380 = vmatpush1.bf16.msra.mxu0 %v470
    %1381 = vmatprep.subr.bf16.mxu0 %v475
    %1382 = vmatpush1.bf16.msra.mxu0 %v474
    %1383 = vmatprep.subr.bf16.mxu0 %v479
    %1384 = vmatpush1.bf16.msra.mxu0 %v478
    %1385 = vmatprep.subr.bf16.mxu0 %v483
    %1386 = vmatpush1.bf16.msra.mxu0 %v482
    %1387 = vmatprep.subr.bf16.mxu0 0
    %1388 = vmatpush1.bf16.msra.mxu0 0
    %1389 = vmatprep.subr.bf16.mxu0 0
    %1390 = vmatpush1.bf16.msra.mxu0 0
    %1391 = vmatprep.subr.bf16.mxu0 0
    %1392 = vmatpush1.bf16.msra.mxu0 0
    %1393 = vmatprep.subr.bf16.mxu0 0
    %1394 = vmatpush1.bf16.msra.mxu0 0
    %1395 = vmatprep.subr.bf16.mxu0 0
    %1396 = vmatpush1.bf16.msra.mxu0 0
    %1397 = vmatprep.subr.bf16.mxu0 0
    %1398 = vmatpush1.bf16.msra.mxu0 0
    %1399 = vmatprep.subr.bf16.mxu0 0
    %1400 = vmatpush1.bf16.msra.mxu0 0
    %1401 = vmatprep.subr.bf16.mxu0 0
    %1402 = vmatpush1.bf16.msra.mxu0 0
    %1403 = vmatprep.mubr.bf16.mxu0 0
    %1404 = vmatmul.mubr.bf16.gmra.mrb[0].mxu0 %v1370
    %v1405 = vpop.f32.mrb[0].mxu0
    %v1406 = vadd.f32 0.0, %v1405
    %v1407 = vpop.f32.mrb[0].mxu0
    %v1408 = vadd.f32 0.0, %v1407
    %v1409 = vpop.f32.mrb[0].mxu0
    %v1410 = vpop.f32.mrb[0].mxu0
    %1411 = vdwg.mxu0
    %1412 = vmatprep.subr.bf16.mxu0 %v457
    %1413 = vmatpush1.bf16.msra.mxu0 %v456
    %1414 = vmatprep.subr.bf16.mxu0 %v461
    %1415 = vmatpush1.bf16.msra.mxu0 %v460
    %1416 = vmatprep.subr.bf16.mxu0 %v465
    %1417 = vmatpush1.bf16.msra.mxu0 %v464
    %1418 = vmatprep.subr.bf16.mxu0 %v469
    %1419 = vmatpush1.bf16.msra.mxu0 %v468
    %1420 = vmatprep.subr.bf16.mxu0 %v473
    %1421 = vmatpush1.bf16.msra.mxu0 %v472
    %1422 = vmatprep.subr.bf16.mxu0 %v477
    %1423 = vmatpush1.bf16.msra.mxu0 %v476
    %1424 = vmatprep.subr.bf16.mxu0 %v481
    %1425 = vmatpush1.bf16.msra.mxu0 %v480
    %1426 = vmatprep.subr.bf16.mxu0 %v485
    %1427 = vmatpush1.bf16.msra.mxu0 %v484
    %1428 = vmatprep.subr.bf16.mxu0 0
    %1429 = vmatpush1.bf16.msra.mxu0 0
    %1430 = vmatprep.subr.bf16.mxu0 0
    %1431 = vmatpush1.bf16.msra.mxu0 0
    %1432 = vmatprep.subr.bf16.mxu0 0
    %1433 = vmatpush1.bf16.msra.mxu0 0
    %1434 = vmatprep.subr.bf16.mxu0 0
    %1435 = vmatpush1.bf16.msra.mxu0 0
    %1436 = vmatprep.subr.bf16.mxu0 0
    %1437 = vmatpush1.bf16.msra.mxu0 0
    %1438 = vmatprep.subr.bf16.mxu0 0
    %1439 = vmatpush1.bf16.msra.mxu0 0
    %1440 = vmatprep.subr.bf16.mxu0 0
    %1441 = vmatpush1.bf16.msra.mxu0 0
    %1442 = vmatprep.subr.bf16.mxu0 0
    %1443 = vmatpush1.bf16.msra.mxu0 0
    %1444 = vmatprep.mubr.bf16.mxu0 0
    %1445 = vmatmul.mubr.bf16.gmra.mrb[0].mxu0 %v1370
    %v1446 = vpop.f32.mrb[0].mxu0
    %v1447 = vadd.f32 0.0, %v1446
    %v1448 = vpop.f32.mrb[0].mxu0
    %v1449 = vadd.f32 0.0, %v1448
    %v1450 = vpop.f32.mrb[0].mxu0
    %v1451 = vpop.f32.mrb[0].mxu0
    %1452 = vdwg.mxu0
    %v1453 = vadd.f32 %v1366, %v1406
    %v1454 = vadd.f32 %v1367, %v1408
    %v1455 = vadd.f32 %v1368, %v1447
    %v1456 = vadd.f32 %v1369, %v1449
    %v1457 = vxor.u32 %v1453, 2147483648
    %v1458 = vmul.f32 %v1457, 1.442695
    %v1459 = vpow.pop %v1458
    %v1460 = vadd.f32 %v1459, 1.0
    %v1461 = vrcp.pop %v1460
    %v1462 = vmul.f32 1.0, %v1461
    %v1463 = vxor.u32 %v1454, 2147483648
    %v1464 = vmul.f32 %v1463, 1.442695
    %v1465 = vpow.pop %v1464
    %v1466 = vadd.f32 %v1465, 1.0
    %v1467 = vrcp.pop %v1466
    %v1468 = vmul.f32 1.0, %v1467
    %v1469 = vtanh.pop %v1455
    %v1470 = vxor.u32 %v1456, 2147483648
    %v1471 = vmul.f32 %v1470, 1.442695
    %v1472 = vpow.pop %v1471
    %v1473 = vadd.f32 %v1472, 1.0
    %v1474 = vrcp.pop %v1473
    %v1475 = vmul.f32 1.0, %v1474
    %v1476 = vmul.f32 %v1468, %v1364
    %v1477 = vmul.f32 %v1462, %v1469
    %v1478 = vadd.f32 %v1476, %v1477
    %v1479 = vtanh.pop %v1478
    %v1480 = vmul.f32 %v1475, %v1479
    %1481 = vst [vmem:[#allocation3] sm:$0xff] %v1480
    %1482 = vst [vmem:[#allocation4] sm:$0xff] %v1478
    %s1483 = scalar_lea.vmem [#allocation11], 56
    %1484 = vst [vmem:[%s1483] sm:$0xff] %v1480
    // Predicated region
    $region34: #{tpu_custom_call.1} parent=1 // pred_check
      %p1485 = pneg %p64
    $region35: #{tpu_custom_call.1} parent=1 // pred_check_branch
      %1487 = sbr.rel (%p1485) target = $region37
    $region36: #{tpu_custom_call.1} parent=1 // pred_region
      %v1488 = vld [vmem:[#allocation3] sm:$0xff]
      %1489 = vst [vmem:[#allocation12] sm:$0xff] %v1488
      %v1490 = vld [vmem:[#allocation4] sm:$0xff]
      %1491 = vst [vmem:[#allocation14] sm:$0xff] %v1490
    $region37: #{tpu_custom_call.1} parent=1 // pred_fallthru
      _
    // Predicated region
    $region38: #{tpu_custom_call.1} parent=1 // pred_check
      _
    $region39: #{tpu_custom_call.1} parent=1 // pred_check_branch
      %1493 = sbr.rel (0) target = $region41
    $region40: #{tpu_custom_call.1} parent=1 // pred_region
      %s1495 = ssub.s32 1024, 1024
      %1496 = vsyncadd [#allocation7], %s1495
      %s1497 = sshll.u32 [#allocation11], 4
      %s1498 = int_to_ptr.vmem [resolvable:$true] %s1497
      %1503 = dma.vmem_to_hbm [thread:$0]  %s1498, 1024, %s4, [#allocation7], 128, 128, 8
    $region41: #{tpu_custom_call.1} parent=1 // pred_fallthru
      _
    // Predicated region
    $region42: #{tpu_custom_call.1} parent=1 // pred_check
      _
    $region43: #{tpu_custom_call.1} parent=1 // pred_check_branch
      %1505 = sbr.rel (0) target = $region45
    $region44: #{tpu_custom_call.1} parent=1 // pred_region
      %s1507 = ssub.s32 128, 128
      %1508 = vsyncadd [#allocation13], %s1507
      %s1510 = sshll.u32 [#allocation12], 4
      %s1511 = int_to_ptr.vmem [resolvable:$true] %s1510
      %1513 = dma.vmem_to_hbm [thread:$0]  %s1511, 128, %s5, [#allocation13]
    $region45: #{tpu_custom_call.1} parent=1 // pred_fallthru
      _
    // Predicated region
    $region46: #{tpu_custom_call.1} parent=1 // pred_check
      _
    $region47: #{tpu_custom_call.1} parent=1 // pred_check_branch
      %1515 = sbr.rel (0) target = $region49
    $region48: #{tpu_custom_call.1} parent=1 // pred_region
      %s1517 = ssub.s32 128, 128
      %1518 = vsyncadd [#allocation13], %s1517
      %s1520 = sshll.u32 [#allocation14], 4
      %s1521 = int_to_ptr.vmem [resolvable:$true] %s1520
      %1523 = dma.vmem_to_hbm [thread:$0]  %s1521, 128, %s6, [#allocation13]
    $region49: #{tpu_custom_call.1} parent=1 // pred_fallthru
      _
    // Predicated region
    $region50: #{tpu_custom_call.1} parent=1 // pred_check
      _
    $region51: #{tpu_custom_call.1} parent=1 // pred_check_branch
      %1525 = sbr.rel (0) target = $region53
    $region52: #{tpu_custom_call.1} parent=1 // pred_region
      %1526 = dma.done [#allocation7], 1024
    $region53: #{tpu_custom_call.1} parent=1 // pred_fallthru
      _
    // Predicated region
    $region54: #{tpu_custom_call.1} parent=1 // pred_check
      _
    $region55: #{tpu_custom_call.1} parent=1 // pred_check_branch
      %1528 = sbr.rel (0) target = $region57
    $region56: #{tpu_custom_call.1} parent=1 // pred_region
      %1529 = dma.done [#allocation13], 128
    $region57: #{tpu_custom_call.1} parent=1 // pred_fallthru
      _
    // Predicated region
    $region58: #{tpu_custom_call.1} parent=1 // pred_check
      _
    $region59: #{tpu_custom_call.1} parent=1 // pred_check_branch
      %1531 = sbr.rel (0) target = $region61
    $region60: #{tpu_custom_call.1} parent=1 // pred_region
      %1532 = dma.done [#allocation13], 128
    $region61: #{tpu_custom_call.1} parent=1 // pred_fallthru
      _
    %1533 = vsyncpa [#allocation6], 1
    %1534 = vsyncpa [#allocation9], 1
    %1535 = vsyncpa [#allocation7], 1
    %1536 = vsyncpa [#allocation13], 1

</llo_original>
